<compile_context>
chip_gen: v7x
topology: tpu7x:2x2x1
jax: 0.10.0
libtpu: 0.0.40
codegen_flags: <defaults>
</compile_context>

<pallas_src>
import jax
import jax.numpy as jnp
from jax import lax
from jax.experimental import pallas as pl
from jax.experimental.pallas import tpu as pltpu


# ------------------------- weight-slab row layout ----------------------------
# All section starts are multiples of 8 so every in-kernel slice is sublane
# aligned.  Lanes are always 128 wide (lane-dense loads).
OFF_W1 = 0        # 75 live rows, lanes 0:64   (conv1 | vconv1 fused, rows (kh,kw,ci))
OFF_B1 = 80       # 1 row,        lanes 0:64
OFF_W2 = 88       # 576 rows,     lanes 0:128  (conv2 | vconv2 block-diag, rows (tap, fused ci))
OFF_B2 = 664      # 1 row
OFF_W1F = 672     # 512 rows                   (fc1 | vfc1 block-diag, rows 128*s + fused ci)
OFF_B1F = 1184    # 1 row
OFF_WF2 = 1192    # 128 rows                   (fc2 cols 0:3, vfc2 cols 64:80)
OFF_BF2 = 1320    # 1 row
OFF_W3 = 1328     # 1 row, vfc3 weight at lanes 64:80 (aligned with h2 value lanes)
OFF_B3 = 1336     # 1 row, vfc3 bias at lane 0
SLAB_ROWS = 1344


def _full_spec(shape):
    # whole array resident in VMEM (everything here is tiny); no grid.
    return pl.BlockSpec(shape, lambda *_: (0,) * len(shape))


# ----------------------------- param init (PyTorch layouts) ------------------

def init_params(key):
    ks = jax.random.split(key, 18)

    def w(k, shape, fan_in):
        return jax.random.normal(k, shape, jnp.float32) / jnp.sqrt(float(fan_in))

    def b(k, shape):
        return jax.random.normal(k, shape, jnp.float32) * 0.01

    return {
        # conv weights in PyTorch OIHW layout, linear weights (out, in)
        "conv1_w":  w(ks[0],  (32, 3, 5, 5),  75),   "conv1_b":  b(ks[1],  (32,)),
        "conv2_w":  w(ks[2],  (64, 32, 3, 3), 288),  "conv2_b":  b(ks[3],  (64,)),
        "fc1_w":    w(ks[4],  (64, 256), 256),       "fc1_b":    b(ks[5],  (64,)),
        "fc2_w":    w(ks[6],  (3, 64), 64),          "fc2_b":    b(ks[7],  (3,)),
        "vconv1_w": w(ks[8],  (32, 3, 5, 5),  75),   "vconv1_b": b(ks[9],  (32,)),
        "vconv2_w": w(ks[10], (64, 32, 3, 3), 288),  "vconv2_b": b(ks[11], (64,)),
        "vfc1_w":   w(ks[12], (64, 256), 256),       "vfc1_b":   b(ks[13], (64,)),
        "vfc2_w":   w(ks[14], (16, 64), 64),         "vfc2_b":   b(ks[15], (16,)),
        "vfc3_w":   w(ks[16], (1, 16), 16),          "vfc3_b":   b(ks[17], (1,)),
    }


# ---------------- one-time weight packing into a single slab -----------------

def pack_params(p):
    """Fuse both heads and pack every weight/bias into one (1344, 128) slab."""
    f32 = jnp.float32

    # conv1 + vconv1 -> rows (kh, kw, ci), 64 fused output lanes
    a1 = jnp.transpose(p["conv1_w"], (2, 3, 1, 0)).reshape(75, 32)
    v1 = jnp.transpose(p["vconv1_w"], (2, 3, 1, 0)).reshape(75, 32)
    w1c = jnp.concatenate([a1, v1], axis=1)                               # (75, 64)
    b1c = jnp.concatenate([p["conv1_b"], p["vconv1_b"]])                  # (64,)

    # conv2 + vconv2 -> block-diagonal, rows (tap, fused in-ch), 128 output lanes
    a2 = jnp.transpose(p["conv2_w"], (2, 3, 1, 0)).reshape(9, 32, 64)
    v2 = jnp.transpose(p["vconv2_w"], (2, 3, 1, 0)).reshape(9, 32, 64)
    z9 = jnp.zeros((9, 32, 64), f32)
    w2c = jnp.concatenate(
        [jnp.concatenate([a2, z9], axis=2),      # action in-ch 0..31 -> out 0..63
         jnp.concatenate([z9, v2], axis=2)],     # value  in-ch 32..63 -> out 64..127
        axis=1).reshape(9 * 64, 128)                                       # (576, 128)
    b2c = jnp.concatenate([p["conv2_b"], p["vconv2_b"]])                   # (128,)

    # fc1 + vfc1: PyTorch flatten is channel-major (feature = c*4 + s); fold that
    # into the weight: row = 128*s + fused_in_channel.
    blocks = []
    z64 = jnp.zeros((64, 64), f32)
    for s in range(4):
        ba = p["fc1_w"][:, s::4].T                                         # (64c, 64j)
        bv = p["vfc1_w"][:, s::4].T
        top = jnp.concatenate([ba, z64], axis=1)
        bot = jnp.concatenate([z64, bv], axis=1)
        blocks.append(jnp.concatenate([top, bot], axis=0))                 # (128, 128)
    w1f = jnp.concatenate(blocks, axis=0)                                  # (512, 128)
    b1f = jnp.concatenate([p["fc1_b"], p["vfc1_b"]])                       # (128,)

    # fc2 + vfc2 into a single 128x128 block matmul (cols 0:3 and 64:80 live)
    wf2 = jnp.zeros((128, 128), f32)
    wf2 = wf2.at[0:64, 0:3].set(p["fc2_w"].T)
    wf2 = wf2.at[64:128, 64:80].set(p["vfc2_w"].T)
    bf2 = jnp.zeros((128,), f32).at[0:3].set(p["fc2_b"]).at[64:80].set(p["vfc2_b"])

    slab = jnp.zeros((SLAB_ROWS, 128), f32)
    slab = slab.at[OFF_W1:OFF_W1 + 75, 0:64].set(w1c)
    slab = slab.at[OFF_B1, 0:64].set(b1c)
    slab = slab.at[OFF_W2:OFF_W2 + 576, :].set(w2c)
    slab = slab.at[OFF_B2, :].set(b2c)
    slab = slab.at[OFF_W1F:OFF_W1F + 512, :].set(w1f)
    slab = slab.at[OFF_B1F, :].set(b1f)
    slab = slab.at[OFF_WF2:OFF_WF2 + 128, :].set(wf2)
    slab = slab.at[OFF_BF2, :].set(bf2)
    slab = slab.at[OFF_W3, 64:80].set(p["vfc3_w"][0])     # lanes 64:80 match h2 value lanes
    slab = slab.at[OFF_B3, 0].set(p["vfc3_b"][0])
    return slab


# ------------------------------ fused forward --------------------------------

def actor_critic_forward(x_nchw, slab):
    batch = x_nchw.shape[0]
    assert x_nchw.shape[1:] == (3, 10, 10), "net implies 3x10x10 inputs (flatten=256)"
    N = batch
    f32 = jnp.float32

    # ---- host-side im2col for conv1 (K=75), rows ordered (i, ph, pw, n) so the
    #      2x2 maxpool is a max of 4 contiguous row blocks in the kernel.
    xp = jnp.pad(jnp.transpose(x_nchw, (0, 2, 3, 1)),
                 ((0, 0), (1, 1), (1, 1), (0, 0)))                          # (N,12,12,3)
    patches = jnp.stack([xp[:, kh:kh + 8, kw:kw + 8, :]
                         for kh in range(5) for kw in range(5)], axis=3)    # (N,8,8,25,3)
    patches = patches.reshape(N, 8, 8, 75)                                  # (n, oh, ow, k)
    p6 = patches.reshape(N, 4, 2, 4, 2, 75)                                 # (n, ph, di, pw, dj, k)
    a1 = jnp.transpose(p6, (2, 4, 1, 3, 0, 5)).reshape(64 * N, 75)          # rows (i, ph, pw, n)

    R1 = 64 * N     # conv1 output rows (4 pool-window blocks of 16N)
    M1 = 16 * N     # pool1 rows (ph, pw, n)
    PAD1 = 36 * N   # zero-padded 6x6 pooled map rows (hp, wp, n)
    R2 = 22 * N     # conv2 row-space (contains finite garbage rows at ow2 in {4,5})
    Q2 = 15 * N     # pool2 candidate rows

    def kernel(a1_ref, slab_ref, out_ref, p1pad_ref, x2_ref):
        # ---- conv1 + vconv1: ONE K=75 matmul, bias + relu fused -------------
        y1 = jnp.maximum(
            jnp.dot(a1_ref[...], slab_ref[OFF_W1:OFF_W1 + 75, 0:64],
                    preferred_element_type=jnp.float32)
            + slab_ref[OFF_B1:OFF_B1 + 1, 0:64], 0.0)                       # (R1, 64)

        # ---- maxpool #1: elementwise max of 4 aligned contiguous blocks -----
        p1 = jnp.maximum(jnp.maximum(y1[0:M1], y1[M1:2 * M1]),
                         jnp.maximum(y1[2 * M1:3 * M1], y1[3 * M1:4 * M1]))  # (M1, 64)

        # ---- zero-padded 6x6 pooled map (rows (hp, wp, n)), 4 block copies ---
        p1pad_ref[...] = jnp.zeros_like(p1pad_ref)
        for ph in range(4):
            dst = ((ph + 1) * 6 + 1) * N
            p1pad_ref[dst:dst + 4 * N, :] = p1[ph * 4 * N:(ph + 1) * 4 * N, :]

        # ---- conv2 im2col: 9 taps lane-packed -> ONE K=576 matmul ------------
        for t in range(9):
            kh, kw = t // 3, t % 3
            off = (kh * 6 + kw) * N
            x2_ref[:, t * 64:(t + 1) * 64] = p1pad_ref[off:off + R2, :]
        y2 = jnp.maximum(
            jnp.dot(x2_ref[...], slab_ref[OFF_W2:OFF_W2 + 576, :],
                    preferred_element_type=jnp.float32)
            + slab_ref[OFF_B2:OFF_B2 + 1, :], 0.0)                          # (R2, 128)

        # ---- maxpool #2: 4-way shifted max (garbage rows are never selected) -
        q2 = jnp.maximum(jnp.maximum(y2[0:Q2], y2[N:N + Q2]),
                         jnp.maximum(y2[6 * N:6 * N + Q2], y2[7 * N:7 * N + Q2]))

        # ---- fc1 + vfc1: ONE K=512 matmul over the 4 pooled cells ------------
        hin = jnp.concatenate(
            [q2[0:N], q2[2 * N:3 * N], q2[12 * N:13 * N], q2[14 * N:15 * N]],
            axis=-1)                                                        # (N, 512)
        h1 = jnp.maximum(
            jnp.dot(hin, slab_ref[OFF_W1F:OFF_W1F + 512, :],
                    preferred_element_type=jnp.float32)
            + slab_ref[OFF_B1F:OFF_B1F + 1, :], 0.0)                        # (N, 128)

        # ---- fc2 + vfc2 (block columns), relu --------------------------------
        h2 = jnp.maximum(
            jnp.dot(h1, slab_ref[OFF_WF2:OFF_WF2 + 128, :],
                    preferred_element_type=jnp.float32)
            + slab_ref[OFF_BF2:OFF_BF2 + 1, :], 0.0)                        # (N, 128)

        # ---- action head: masked softmax over lanes 0:3 (full-width math) ----
        lane = lax.broadcasted_iota(jnp.int32, (N, 128), 1)
        is_logit = lane < 3
        m = jnp.max(jnp.where(is_logit, h2, -1e30), axis=-1, keepdims=True)
        e = jnp.where(is_logit, jnp.exp(h2 - m), 0.0)
        probs = e / jnp.sum(e, axis=-1, keepdims=True)      # exact divide: sum==1

        # ---- value head: vfc3 on VPU/XLU (mul by weight row + lane reduce) ---
        vsum = jnp.sum(h2 * slab_ref[OFF_W3:OFF_W3 + 1, :], axis=-1, keepdims=True)
        val = jnp.maximum(vsum + slab_ref[OFF_B3:OFF_B3 + 1, 0:1], 0.0)     # (N, 1)

        # ---- single unmasked lane-dense store (lanes 0:3 probs, lane 3 value)
        out_ref[...] = probs + jnp.where(lane == 3, val, 0.0)

    out = pl.pallas_call(
        kernel,
        out_shape=jax.ShapeDtypeStruct((N, 128), jnp.float32),
        in_specs=[_full_spec(a1.shape), _full_spec(slab.shape)],
        out_specs=_full_spec((N, 128)),
        scratch_shapes=[
            pltpu.VMEM((PAD1, 64), f32),    # zero-padded pool1 map
            pltpu.VMEM((R2, 576), f32),     # conv2 lane-packed im2col
        ],
    )(a1, slab)

    return out[:, 0:3], out[:, 3:4]


# ------------------------ plain-JAX reference (for checking) -----------------

def _conv_ref(x, w, b, pad):
    y = jax.lax.conv_general_dilated(x, w, (1, 1), ((pad, pad), (pad, pad)),
                                     dimension_numbers=("NCHW", "OIHW", "NCHW"))
    return y + b[None, :, None, None]


def _pool_ref(x):
    return jax.lax.reduce_window(x, -jnp.inf, jax.lax.max,
                                 (1, 1, 2, 2), (1, 1, 2, 2), "VALID")


def reference_forward(x, p):
    relu = jax.nn.relu
    a = relu(_conv_ref(x, p["conv1_w"], p["conv1_b"], 1))
    a = _pool_ref(a)
    a = relu(_conv_ref(a, p["conv2_w"], p["conv2_b"], 1))
    a = _pool_ref(a)
    a = a.reshape(-1, 256)
    a = relu(a @ p["fc1_w"].T + p["fc1_b"])
    a = relu(a @ p["fc2_w"].T + p["fc2_b"])
    probs = jax.nn.softmax(a, axis=-1)
    v = relu(_conv_ref(x, p["vconv1_w"], p["vconv1_b"], 1))
    v = _pool_ref(v)
    v = relu(_conv_ref(v, p["vconv2_w"], p["vconv2_b"], 1))
    v = _pool_ref(v)
    v = v.reshape(-1, 256)
    v = relu(v @ p["vfc1_w"].T + p["vfc1_b"])
    v = relu(v @ p["vfc2_w"].T + p["vfc2_b"])
    v = relu(v @ p["vfc3_w"].T + p["vfc3_b"])
    return probs, v


# ------------------------------ main ------------------------------------------

if __name__ == "__main__":
    key = jax.random.PRNGKey(0)
    pkey, xkey = jax.random.split(key)
    params = init_params(pkey)
    slab = pack_params(params)            # one-time head-fused weight packing

    # (N, C, H, W) = (2, 3, 10, 10): the spatial size implied by
    # conv(k5,p1) -> pool2 -> conv(k3,p1) -> pool2 -> flatten(256) with 64 ch.
    x = jax.random.normal(xkey, (2, 3, 10, 10), jnp.float32)

    fwd = jax.jit(actor_critic_forward)
    probs, values = fwd(x, slab)
    probs = jax.block_until_ready(probs)
    values = jax.block_until_ready(values)

    assert probs.shape == (2, 3) and values.shape == (2, 1)
    assert bool(jnp.allclose(jnp.sum(probs, axis=-1), 1.0, atol=1e-4))
    assert bool(jnp.all(values >= 0.0))   # final ReLU in the value head

    # compare against a plain-XLA reference (loose tol: default-precision MXU)
    ref_probs, ref_values = jax.jit(reference_forward)(x, params)
    assert bool(jnp.allclose(probs, ref_probs, atol=5e-2, rtol=5e-2))
    assert bool(jnp.allclose(values, ref_values, atol=5e-2, rtol=5e-2))

    print("KERNEL_OK")
</pallas_src>

<mosaic_0001>
module attributes {stable_mosaic.version = 11 : i64} {
  func.func @kernel(%arg0: memref<128x75xf32, #tpu.memory_space<vmem>>, %arg1: memref<1344x128xf32, #tpu.memory_space<vmem>>, %arg2: memref<2x128xf32, #tpu.memory_space<vmem>>, %arg3: memref<72x64xf32, #tpu.memory_space<vmem>>, %arg4: memref<44x576xf32, #tpu.memory_space<vmem>>) attributes {dimension_semantics = [], scalar_prefetch = 0 : i64, scratch_operands = 2 : i64, tpu.core_type = #tpu.core_type<tc>} {
    %c0 = arith.constant 0 : index
    %c0_0 = arith.constant 0 : index
    %0 = vector.load %arg0[%c0, %c0_0] : memref<128x75xf32, #tpu.memory_space<vmem>>, vector<128x75xf32>
    %c0_1 = arith.constant 0 : index
    %c0_2 = arith.constant 0 : index
    %1 = vector.load %arg1[%c0_1, %c0_2] : memref<1344x128xf32, #tpu.memory_space<vmem>>, vector<75x64xf32>
    %cst = arith.constant dense<0.000000e+00> : vector<128x64xf32>
    %2 = tpu.matmul %0, %1, %cst {dimension_numbers = #tpu.dot_dimension_numbers<[1], [0], [0], [1], [0, 0, 1, 1], [], []>} : vector<128x75xf32>, vector<75x64xf32>, vector<128x64xf32> -> vector<128x64xf32>
    %c80 = arith.constant 80 : index
    %c0_3 = arith.constant 0 : index
    %3 = vector.load %arg1[%c80, %c0_3] : memref<1344x128xf32, #tpu.memory_space<vmem>>, vector<1x64xf32>
    %4 = vector.broadcast %3 : vector<1x64xf32> to vector<128x64xf32>
    %5 = arith.addf %2, %4 : vector<128x64xf32>
    %cst_4 = arith.constant 0.000000e+00 : f32
    %6 = vector.broadcast %cst_4 : f32 to vector<128x64xf32>
    %7 = arith.maximumf %5, %6 : vector<128x64xf32>
    %8 = vector.extract_strided_slice %7 {offsets = [0, 0], sizes = [32, 64], strides = [1, 1]} : vector<128x64xf32> to vector<32x64xf32>
    %9 = vector.extract_strided_slice %7 {offsets = [32, 0], sizes = [32, 64], strides = [1, 1]} : vector<128x64xf32> to vector<32x64xf32>
    %10 = arith.maximumf %8, %9 : vector<32x64xf32>
    %11 = vector.extract_strided_slice %7 {offsets = [64, 0], sizes = [32, 64], strides = [1, 1]} : vector<128x64xf32> to vector<32x64xf32>
    %12 = vector.extract_strided_slice %7 {offsets = [96, 0], sizes = [32, 64], strides = [1, 1]} : vector<128x64xf32> to vector<32x64xf32>
    %13 = arith.maximumf %11, %12 : vector<32x64xf32>
    %14 = arith.maximumf %10, %13 : vector<32x64xf32>
    %cst_5 = arith.constant 0.000000e+00 : f32
    %15 = vector.broadcast %cst_5 : f32 to vector<72x64xf32>
    %c0_6 = arith.constant 0 : index
    %c0_7 = arith.constant 0 : index
    %16 = vector.load %arg3[%c0_6, %c0_7] : memref<72x64xf32, #tpu.memory_space<vmem>>, vector<72x64xf32>
    tpu.vector_store %arg3[%c0_6, %c0_7], %15 {strides = array<i32>} : memref<72x64xf32, #tpu.memory_space<vmem>>, vector<72x64xf32>,
    %17 = vector.extract_strided_slice %14 {offsets = [0, 0], sizes = [8, 64], strides = [1, 1]} : vector<32x64xf32> to vector<8x64xf32>
    %c14 = arith.constant 14 : index
    %c0_8 = arith.constant 0 : index
    %18 = vector.load %arg3[%c14, %c0_8] : memref<72x64xf32, #tpu.memory_space<vmem>>, vector<8x64xf32>
    tpu.vector_store %arg3[%c14, %c0_8], %17 {strides = array<i32>} : memref<72x64xf32, #tpu.memory_space<vmem>>, vector<8x64xf32>,
    %19 = vector.extract_strided_slice %14 {offsets = [8, 0], sizes = [8, 64], strides = [1, 1]} : vector<32x64xf32> to vector<8x64xf32>
    %c26 = arith.constant 26 : index
    %c0_9 = arith.constant 0 : index
    %20 = vector.load %arg3[%c26, %c0_9] : memref<72x64xf32, #tpu.memory_space<vmem>>, vector<8x64xf32>
    tpu.vector_store %arg3[%c26, %c0_9], %19 {strides = array<i32>} : memref<72x64xf32, #tpu.memory_space<vmem>>, vector<8x64xf32>,
    %21 = vector.extract_strided_slice %14 {offsets = [16, 0], sizes = [8, 64], strides = [1, 1]} : vector<32x64xf32> to vector<8x64xf32>
    %c38 = arith.constant 38 : index
    %c0_10 = arith.constant 0 : index
    %22 = vector.load %arg3[%c38, %c0_10] : memref<72x64xf32, #tpu.memory_space<vmem>>, vector<8x64xf32>
    tpu.vector_store %arg3[%c38, %c0_10], %21 {strides = array<i32>} : memref<72x64xf32, #tpu.memory_space<vmem>>, vector<8x64xf32>,
    %23 = vector.extract_strided_slice %14 {offsets = [24, 0], sizes = [8, 64], strides = [1, 1]} : vector<32x64xf32> to vector<8x64xf32>
    %c50 = arith.constant 50 : index
    %c0_11 = arith.constant 0 : index
    %24 = vector.load %arg3[%c50, %c0_11] : memref<72x64xf32, #tpu.memory_space<vmem>>, vector<8x64xf32>
    tpu.vector_store %arg3[%c50, %c0_11], %23 {strides = array<i32>} : memref<72x64xf32, #tpu.memory_space<vmem>>, vector<8x64xf32>,
    %c0_12 = arith.constant 0 : index
    %c0_13 = arith.constant 0 : index
    %25 = vector.load %arg3[%c0_12, %c0_13] : memref<72x64xf32, #tpu.memory_space<vmem>>, vector<44x64xf32>
    %c0_14 = arith.constant 0 : index
    %c0_15 = arith.constant 0 : index
    %26 = vector.load %arg4[%c0_14, %c0_15] : memref<44x576xf32, #tpu.memory_space<vmem>>, vector<44x64xf32>
    tpu.vector_store %arg4[%c0_14, %c0_15], %25 {strides = array<i32>} : memref<44x576xf32, #tpu.memory_space<vmem>>, vector<44x64xf32>,
    %c2 = arith.constant 2 : index
    %c0_16 = arith.constant 0 : index
    %27 = vector.load %arg3[%c2, %c0_16] : memref<72x64xf32, #tpu.memory_space<vmem>>, vector<44x64xf32>
    %c0_17 = arith.constant 0 : index
    %c64 = arith.constant 64 : index
    %28 = vector.load %arg4[%c0_17, %c64] : memref<44x576xf32, #tpu.memory_space<vmem>>, vector<44x64xf32>
    tpu.vector_store %arg4[%c0_17, %c64], %27 {strides = array<i32>} : memref<44x576xf32, #tpu.memory_space<vmem>>, vector<44x64xf32>,
    %c4 = arith.constant 4 : index
    %c0_18 = arith.constant 0 : index
    %29 = vector.load %arg3[%c4, %c0_18] : memref<72x64xf32, #tpu.memory_space<vmem>>, vector<44x64xf32>
    %c0_19 = arith.constant 0 : index
    %c128 = arith.constant 128 : index
    %30 = vector.load %arg4[%c0_19, %c128] : memref<44x576xf32, #tpu.memory_space<vmem>>, vector<44x64xf32>
    tpu.vector_store %arg4[%c0_19, %c128], %29 {strides = array<i32>} : memref<44x576xf32, #tpu.memory_space<vmem>>, vector<44x64xf32>,
    %c12 = arith.constant 12 : index
    %c0_20 = arith.constant 0 : index
    %31 = vector.load %arg3[%c12, %c0_20] : memref<72x64xf32, #tpu.memory_space<vmem>>, vector<44x64xf32>
    %c0_21 = arith.constant 0 : index
    %c192 = arith.constant 192 : index
    %32 = vector.load %arg4[%c0_21, %c192] : memref<44x576xf32, #tpu.memory_space<vmem>>, vector<44x64xf32>
    tpu.vector_store %arg4[%c0_21, %c192], %31 {strides = array<i32>} : memref<44x576xf32, #tpu.memory_space<vmem>>, vector<44x64xf32>,
    %c14_22 = arith.constant 14 : index
    %c0_23 = arith.constant 0 : index
    %33 = vector.load %arg3[%c14_22, %c0_23] : memref<72x64xf32, #tpu.memory_space<vmem>>, vector<44x64xf32>
    %c0_24 = arith.constant 0 : index
    %c256 = arith.constant 256 : index
    %34 = vector.load %arg4[%c0_24, %c256] : memref<44x576xf32, #tpu.memory_space<vmem>>, vector<44x64xf32>
    tpu.vector_store %arg4[%c0_24, %c256], %33 {strides = array<i32>} : memref<44x576xf32, #tpu.memory_space<vmem>>, vector<44x64xf32>,
    %c16 = arith.constant 16 : index
    %c0_25 = arith.constant 0 : index
    %35 = vector.load %arg3[%c16, %c0_25] : memref<72x64xf32, #tpu.memory_space<vmem>>, vector<44x64xf32>
    %c0_26 = arith.constant 0 : index
    %c320 = arith.constant 320 : index
    %36 = vector.load %arg4[%c0_26, %c320] : memref<44x576xf32, #tpu.memory_space<vmem>>, vector<44x64xf32>
    tpu.vector_store %arg4[%c0_26, %c320], %35 {strides = array<i32>} : memref<44x576xf32, #tpu.memory_space<vmem>>, vector<44x64xf32>,
    %c24 = arith.constant 24 : index
    %c0_27 = arith.constant 0 : index
    %37 = vector.load %arg3[%c24, %c0_27] : memref<72x64xf32, #tpu.memory_space<vmem>>, vector<44x64xf32>
    %c0_28 = arith.constant 0 : index
    %c384 = arith.constant 384 : index
    %38 = vector.load %arg4[%c0_28, %c384] : memref<44x576xf32, #tpu.memory_space<vmem>>, vector<44x64xf32>
    tpu.vector_store %arg4[%c0_28, %c384], %37 {strides = array<i32>} : memref<44x576xf32, #tpu.memory_space<vmem>>, vector<44x64xf32>,
    %c26_29 = arith.constant 26 : index
    %c0_30 = arith.constant 0 : index
    %39 = vector.load %arg3[%c26_29, %c0_30] : memref<72x64xf32, #tpu.memory_space<vmem>>, vector<44x64xf32>
    %c0_31 = arith.constant 0 : index
    %c448 = arith.constant 448 : index
    %40 = vector.load %arg4[%c0_31, %c448] : memref<44x576xf32, #tpu.memory_space<vmem>>, vector<44x64xf32>
    tpu.vector_store %arg4[%c0_31, %c448], %39 {strides = array<i32>} : memref<44x576xf32, #tpu.memory_space<vmem>>, vector<44x64xf32>,
    %c28 = arith.constant 28 : index
    %c0_32 = arith.constant 0 : index
    %41 = vector.load %arg3[%c28, %c0_32] : memref<72x64xf32, #tpu.memory_space<vmem>>, vector<44x64xf32>
    %c0_33 = arith.constant 0 : index
    %c512 = arith.constant 512 : index
    %42 = vector.load %arg4[%c0_33, %c512] : memref<44x576xf32, #tpu.memory_space<vmem>>, vector<44x64xf32>
    tpu.vector_store %arg4[%c0_33, %c512], %41 {strides = array<i32>} : memref<44x576xf32, #tpu.memory_space<vmem>>, vector<44x64xf32>,
    %c0_34 = arith.constant 0 : index
    %c0_35 = arith.constant 0 : index
    %43 = vector.load %arg4[%c0_34, %c0_35] : memref<44x576xf32, #tpu.memory_space<vmem>>, vector<44x576xf32>
    %c88 = arith.constant 88 : index
    %c0_36 = arith.constant 0 : index
    %44 = vector.load %arg1[%c88, %c0_36] : memref<1344x128xf32, #tpu.memory_space<vmem>>, vector<576x128xf32>
    %cst_37 = arith.constant dense<0.000000e+00> : vector<44x128xf32>
    %45 = tpu.matmul %43, %44, %cst_37 {dimension_numbers = #tpu.dot_dimension_numbers<[1], [0], [0], [1], [0, 0, 1, 1], [], []>} : vector<44x576xf32>, vector<576x128xf32>, vector<44x128xf32> -> vector<44x128xf32>
    %c664 = arith.constant 664 : index
    %c0_38 = arith.constant 0 : index
    %46 = vector.load %arg1[%c664, %c0_38] : memref<1344x128xf32, #tpu.memory_space<vmem>>, vector<1x128xf32>
    %47 = vector.broadcast %46 : vector<1x128xf32> to vector<44x128xf32>
    %48 = arith.addf %45, %47 : vector<44x128xf32>
    %cst_39 = arith.constant 0.000000e+00 : f32
    %49 = vector.broadcast %cst_39 : f32 to vector<44x128xf32>
    %50 = arith.maximumf %48, %49 : vector<44x128xf32>
    %51 = vector.extract_strided_slice %50 {offsets = [0, 0], sizes = [30, 128], strides = [1, 1]} : vector<44x128xf32> to vector<30x128xf32>
    %52 = vector.extract_strided_slice %50 {offsets = [2, 0], sizes = [30, 128], strides = [1, 1]} : vector<44x128xf32> to vector<30x128xf32>
    %53 = arith.maximumf %51, %52 : vector<30x128xf32>
    %54 = vector.extract_strided_slice %50 {offsets = [12, 0], sizes = [30, 128], strides = [1, 1]} : vector<44x128xf32> to vector<30x128xf32>
    %55 = vector.extract_strided_slice %50 {offsets = [14, 0], sizes = [30, 128], strides = [1, 1]} : vector<44x128xf32> to vector<30x128xf32>
    %56 = arith.maximumf %54, %55 : vector<30x128xf32>
    %57 = arith.maximumf %53, %56 : vector<30x128xf32>
    %58 = vector.extract_strided_slice %57 {offsets = [0, 0], sizes = [2, 128], strides = [1, 1]} : vector<30x128xf32> to vector<2x128xf32>
    %59 = vector.extract_strided_slice %57 {offsets = [4, 0], sizes = [2, 128], strides = [1, 1]} : vector<30x128xf32> to vector<2x128xf32>
    %60 = vector.extract_strided_slice %57 {offsets = [24, 0], sizes = [2, 128], strides = [1, 1]} : vector<30x128xf32> to vector<2x128xf32>
    %61 = vector.extract_strided_slice %57 {offsets = [28, 0], sizes = [2, 128], strides = [1, 1]} : vector<30x128xf32> to vector<2x128xf32>
    %62 = tpu.concatenate %58, %59, %60, %61 in 1 : vector<2x128xf32>, vector<2x128xf32>, vector<2x128xf32>, vector<2x128xf32> -> vector<2x512xf32>
    %c672 = arith.constant 672 : index
    %c0_40 = arith.constant 0 : index
    %63 = vector.load %arg1[%c672, %c0_40] : memref<1344x128xf32, #tpu.memory_space<vmem>>, vector<512x128xf32>
    %cst_41 = arith.constant dense<0.000000e+00> : vector<2x128xf32>
    %64 = tpu.matmul %62, %63, %cst_41 {dimension_numbers = #tpu.dot_dimension_numbers<[1], [0], [0], [1], [0, 0, 1, 1], [], []>} : vector<2x512xf32>, vector<512x128xf32>, vector<2x128xf32> -> vector<2x128xf32>
    %c1184 = arith.constant 1184 : index
    %c0_42 = arith.constant 0 : index
    %65 = vector.load %arg1[%c1184, %c0_42] : memref<1344x128xf32, #tpu.memory_space<vmem>>, vector<1x128xf32>
    %66 = vector.broadcast %65 : vector<1x128xf32> to vector<2x128xf32>
    %67 = arith.addf %64, %66 : vector<2x128xf32>
    %cst_43 = arith.constant 0.000000e+00 : f32
    %68 = vector.broadcast %cst_43 : f32 to vector<2x128xf32>
    %69 = arith.maximumf %67, %68 : vector<2x128xf32>
    %c1192 = arith.constant 1192 : index
    %c0_44 = arith.constant 0 : index
    %70 = vector.load %arg1[%c1192, %c0_44] : memref<1344x128xf32, #tpu.memory_space<vmem>>, vector<128x128xf32>
    %cst_45 = arith.constant dense<0.000000e+00> : vector<2x128xf32>
    %71 = tpu.matmul %69, %70, %cst_45 {dimension_numbers = #tpu.dot_dimension_numbers<[1], [0], [0], [1], [0, 0, 1, 1], [], []>} : vector<2x128xf32>, vector<128x128xf32>, vector<2x128xf32> -> vector<2x128xf32>
    %c1320 = arith.constant 1320 : index
    %c0_46 = arith.constant 0 : index
    %72 = vector.load %arg1[%c1320, %c0_46] : memref<1344x128xf32, #tpu.memory_space<vmem>>, vector<1x128xf32>
    %73 = vector.broadcast %72 : vector<1x128xf32> to vector<2x128xf32>
    %74 = arith.addf %71, %73 : vector<2x128xf32>
    %cst_47 = arith.constant 0.000000e+00 : f32
    %75 = vector.broadcast %cst_47 : f32 to vector<2x128xf32>
    %76 = arith.maximumf %74, %75 : vector<2x128xf32>
    %77 = tpu.iota {dimensions = array<i32: 1>} : vector<2x128xi32>
    %c3_i32 = arith.constant 3 : i32
    %78 = vector.broadcast %c3_i32 : i32 to vector<2x128xi32>
    %79 = arith.cmpi slt, %77, %78 : vector<2x128xi32>
    %cst_48 = arith.constant -1.000000e+30 : f32
    %80 = vector.broadcast %cst_48 : f32 to vector<2x128xf32>
    %81 = arith.select %79, %76, %80 : vector<2x128xi1>, vector<2x128xf32>
    %cst_49 = arith.constant dense<0xFF800000> : vector<2xf32>
    %82 = vector.multi_reduction <maximumf>, %81, %cst_49 [1] : vector<2x128xf32> to vector<2xf32>
    %83 = vector.shape_cast %82 : vector<2xf32> to vector<2x1xf32>
    %84 = vector.broadcast %83 : vector<2x1xf32> to vector<2x128xf32>
    %85 = arith.subf %76, %84 : vector<2x128xf32>
    %86 = math.exp %85 : vector<2x128xf32>
    %cst_50 = arith.constant 0.000000e+00 : f32
    %87 = vector.broadcast %cst_50 : f32 to vector<2x128xf32>
    %88 = arith.select %79, %86, %87 : vector<2x128xi1>, vector<2x128xf32>
    %cst_51 = arith.constant dense<0.000000e+00> : vector<2xf32>
    %89 = vector.multi_reduction <add>, %88, %cst_51 [1] : vector<2x128xf32> to vector<2xf32>
    %90 = vector.shape_cast %89 : vector<2xf32> to vector<2x1xf32>
    %91 = vector.broadcast %90 : vector<2x1xf32> to vector<2x128xf32>
    %92 = arith.divf %88, %91 : vector<2x128xf32>
    %c1328 = arith.constant 1328 : index
    %c0_52 = arith.constant 0 : index
    %93 = vector.load %arg1[%c1328, %c0_52] : memref<1344x128xf32, #tpu.memory_space<vmem>>, vector<1x128xf32>
    %94 = vector.broadcast %93 : vector<1x128xf32> to vector<2x128xf32>
    %95 = arith.mulf %76, %94 : vector<2x128xf32>
    %cst_53 = arith.constant dense<0.000000e+00> : vector<2xf32>
    %96 = vector.multi_reduction <add>, %95, %cst_53 [1] : vector<2x128xf32> to vector<2xf32>
    %97 = vector.shape_cast %96 : vector<2xf32> to vector<2x1xf32>
    %c1336 = arith.constant 1336 : index
    %c0_54 = arith.constant 0 : index
    %98 = vector.load %arg1[%c1336, %c0_54] : memref<1344x128xf32, #tpu.memory_space<vmem>>, vector<1x1xf32>
    %99 = vector.broadcast %98 : vector<1x1xf32> to vector<2x1xf32>
    %100 = arith.addf %97, %99 : vector<2x1xf32>
    %cst_55 = arith.constant 0.000000e+00 : f32
    %101 = vector.broadcast %cst_55 : f32 to vector<2x1xf32>
    %102 = arith.maximumf %100, %101 : vector<2x1xf32>
    %c3_i32_56 = arith.constant 3 : i32
    %103 = vector.broadcast %c3_i32_56 : i32 to vector<2x128xi32>
    %104 = arith.cmpi eq, %77, %103 : vector<2x128xi32>
    %cst_57 = arith.constant 0.000000e+00 : f32
    %105 = vector.shape_cast %102 : vector<2x1xf32> to vector<2x1xf32>
    %106 = vector.broadcast %105 : vector<2x1xf32> to vector<2x128xf32>
    %107 = vector.broadcast %cst_57 : f32 to vector<2x128xf32>
    %108 = arith.select %104, %106, %107 : vector<2x128xi1>, vector<2x128xf32>
    %109 = arith.addf %92, %108 : vector<2x128xf32>
    %c0_58 = arith.constant 0 : index
    %c0_59 = arith.constant 0 : index
    %110 = vector.load %arg2[%c0_58, %c0_59] : memref<2x128xf32, #tpu.memory_space<vmem>>, vector<2x128xf32>
    tpu.vector_store %arg2[%c0_58, %c0_59], %109 {strides = array<i32>} : memref<2x128xf32, #tpu.memory_space<vmem>>, vector<2x128xf32>,
    return
  }
}

</mosaic_0001>

<llo_original>
// kernel: actor_critic_forward.1
$region0: #{actor_critic_forward.1}
  #allocation0 [shape = 'u32[]', space=smem, size = 0x4, offset = 0x4, fixed_abs, tag = 'smem constant byte address 0x4 - core index']
  #allocation1 [shape = 'u32[144,128]{1,0:T(1,128)}', space=vmem, size = 0x12000, scoped, tag = 'internal scratch']
  #allocation2 [shape = 'f32[72,64]{1,0:T(8,128)}', space=vmem, size = 0x9000, scoped, tag = 'scratch operand']
  #allocation3 [shape = 'f32[44,576]{1,0:T(8,128)}', space=vmem, size = 0x1e000, scoped, tag = 'scratch operand']
  %s0 = inlined_call_operand.vmem [shape: f32[128,75], index: 0, kind: input, shape index: {}]
  %s1 = inlined_call_operand.vmem [shape: f32[1344,128], index: 1, kind: input, shape index: {}]
  %s2 = inlined_call_operand.vmem [shape: f32[2,128], index: 2, kind: output, shape index: {}]
  %s3 = sld [smem:[#allocation0]]
  $region18: #{actor_critic_forward.1} parent=0
    _
  %s5 = ssub.s32 1, %s3
  %s6 = scalar_select 0, %s5, %s3
  // Predicated region
  $region2: #{actor_critic_forward.1} parent=0 // pred_check
    _
  $region3: #{actor_critic_forward.1} parent=0 // pred_check_branch
    %8 = sbr.rel (0) target = $region5
  $region4: #{actor_critic_forward.1} parent=0 // pred_region
    _
  $region5: #{actor_critic_forward.1} parent=0 // pred_fallthru
    _
  // Predicated region
  $region6: #{actor_critic_forward.1} parent=0 // pred_check
    _
  $region7: #{actor_critic_forward.1} parent=0 // pred_check_branch
    %10 = sbr.rel (0) target = $region9
  $region8: #{actor_critic_forward.1} parent=0 // pred_region
    _
  $region9: #{actor_critic_forward.1} parent=0 // pred_fallthru
    _
  %v11 = vld [vmem:[%s0] sm:$0xff]
  %v12 = vld [vmem:[%s0 + $0x8] sm:$0xff]
  %v13 = vld [vmem:[%s0 + $0x10] sm:$0xff]
  %v14 = vld [vmem:[%s0 + $0x18] sm:$0xff]
  %v15 = vld [vmem:[%s0 + $0x20] sm:$0xff]
  %v16 = vld [vmem:[%s0 + $0x28] sm:$0xff]
  %v17 = vld [vmem:[%s0 + $0x30] sm:$0xff]
  %v18 = vld [vmem:[%s0 + $0x38] sm:$0xff]
  %v19 = vld [vmem:[%s0 + $0x40] sm:$0xff]
  %v20 = vld [vmem:[%s0 + $0x48] sm:$0xff]
  %v21 = vld [vmem:[%s0 + $0x50] sm:$0xff]
  %v22 = vld [vmem:[%s0 + $0x58] sm:$0xff]
  %v23 = vld [vmem:[%s0 + $0x60] sm:$0xff]
  %v24 = vld [vmem:[%s0 + $0x68] sm:$0xff]
  %v25 = vld [vmem:[%s0 + $0x70] sm:$0xff]
  %v26 = vld [vmem:[%s0 + $0x78] sm:$0xff]
  %v27 = vld [vmem:[%s1] sm:$0xff]
  %v28 = vld [vmem:[%s1 + $0x8] sm:$0xff]
  %v29 = vld [vmem:[%s1 + $0x10] sm:$0xff]
  %v30 = vld [vmem:[%s1 + $0x18] sm:$0xff]
  %v31 = vld [vmem:[%s1 + $0x20] sm:$0xff]
  %v32 = vld [vmem:[%s1 + $0x28] sm:$0xff]
  %v33 = vld [vmem:[%s1 + $0x30] sm:$0xff]
  %v34 = vld [vmem:[%s1 + $0x38] sm:$0xff]
  %v35 = vld [vmem:[%s1 + $0x40] sm:$0xff]
  %v36 = vld [vmem:[%s1 + $0x48] sm:$0x7]
  %v37 = vld [vmem:[%s1 + $0x50] sm:$0x1]
  %v38 = vlaneseq
  %v39 = vshrl.u32 %v38, 7
  %v40 = vsub.s32 0, %v39
  %v41 = vrot.slane %v37, %v40
  %vm42 = vcmask 613376
  %v44 = vsel %vm42, %v11, 0
  %v47 = vsel %vm42, %v12, 0
  %v50 = vsel %vm42, %v13, 0
  %v53 = vsel %vm42, %v14, 0
  %v56 = vsel %vm42, %v15, 0
  %v59 = vsel %vm42, %v16, 0
  %v62 = vsel %vm42, %v17, 0
  %v65 = vsel %vm42, %v18, 0
  %v68 = vsel %vm42, %v19, 0
  %v71 = vsel %vm42, %v20, 0
  %v74 = vsel %vm42, %v21, 0
  %v77 = vsel %vm42, %v22, 0
  %v80 = vsel %vm42, %v23, 0
  %v83 = vsel %vm42, %v24, 0
  %v86 = vsel %vm42, %v25, 0
  %v89 = vsel %vm42, %v26, 0
  %vm91 = vcmask 1042432
  %v93 = vsel %vm91, %v36, 0
  %95 = vmatprep.subr.mxu0 0.0
  %96 = vmatpush1.msra.mxu0 %v27
  %97 = vmatprep.subr.mxu0 0.0
  %98 = vmatpush1.msra.mxu0 %v28
  %99 = vmatprep.subr.mxu0 0.0
  %100 = vmatpush1.msra.mxu0 %v29
  %101 = vmatprep.subr.mxu0 0.0
  %102 = vmatpush1.msra.mxu0 %v30
  %103 = vmatprep.subr.mxu0 0.0
  %104 = vmatpush1.msra.mxu0 %v31
  %105 = vmatprep.subr.mxu0 0.0
  %106 = vmatpush1.msra.mxu0 %v32
  %107 = vmatprep.subr.mxu0 0.0
  %108 = vmatpush1.msra.mxu0 %v33
  %109 = vmatprep.subr.mxu0 0.0
  %110 = vmatpush1.msra.mxu0 %v34
  %111 = vmatprep.subr.mxu0 0.0
  %112 = vmatpush1.msra.mxu0 %v35
  %113 = vmatprep.subr.mxu0 0.0
  %114 = vmatpush1.msra.mxu0 %v93
  %115 = vmatprep.subr.mxu0 0.0
  %116 = vmatpush1.msra.mxu0 0.0
  %117 = vmatprep.subr.mxu0 0.0
  %118 = vmatpush1.msra.mxu0 0.0
  %119 = vmatprep.subr.mxu0 0.0
  %120 = vmatpush1.msra.mxu0 0.0
  %121 = vmatprep.subr.mxu0 0.0
  %122 = vmatpush1.msra.mxu0 0.0
  %123 = vmatprep.subr.mxu0 0.0
  %124 = vmatpush1.msra.mxu0 0.0
  %125 = vmatprep.subr.mxu0 0.0
  %126 = vmatpush1.msra.mxu0 0.0
  %127 = vmatprep.subr.mxu0 0.0
  %128 = vmatpush1.msra.mxu0 0.0
  %129 = vmatprep.subr.mxu0 0.0
  %130 = vmatpush1.msra.mxu0 0.0
  %131 = vmatprep.subr.mxu0 0.0
  %132 = vmatpush1.msra.mxu0 0.0
  %133 = vmatprep.subr.mxu0 0.0
  %134 = vmatpush1.msra.mxu0 0.0
  %135 = vmatprep.subr.mxu0 0.0
  %136 = vmatpush1.msra.mxu0 0.0
  %137 = vmatprep.subr.mxu0 0.0
  %138 = vmatpush1.msra.mxu0 0.0
  %139 = vmatprep.subr.mxu0 0.0
  %140 = vmatpush1.msra.mxu0 0.0
  %141 = vmatprep.subr.mxu0 0.0
  %142 = vmatpush1.msra.mxu0 0.0
  %143 = vmatprep.subr.mxu0 0.0
  %144 = vmatpush1.msra.mxu0 0.0
  %145 = vmatprep.subr.mxu0 0.0
  %146 = vmatpush1.msra.mxu0 0.0
  %147 = vmatprep.subr.mxu0 0.0
  %148 = vmatpush1.msra.mxu0 0.0
  %149 = vmatprep.subr.mxu0 0.0
  %150 = vmatpush1.msra.mxu0 0.0
  %151 = vmatprep.subr.mxu0 0.0
  %152 = vmatpush1.msra.mxu0 0.0
  %153 = vmatprep.subr.mxu0 0.0
  %154 = vmatpush1.msra.mxu0 0.0
  %155 = vmatprep.subr.mxu0 0.0
  %156 = vmatpush1.msra.mxu0 0.0
  %157 = vmatprep.subr.mxu0 0.0
  %158 = vmatpush1.msra.mxu0 0.0
  %159 = vmatprep.mubr.f32.mxu0 0.0
  %160 = vmatmul.mubr.f32.gmra.mrb[0].mxu0 %v44
  %v161 = vpop.f32.mrb[0].mxu0
  %v162 = vadd.f32 %v41, %v161
  %v163 = vpop.f32.mrb[0].mxu0
  %164 = vmatprep.mubr.f32.mxu0 0.0
  %165 = vmatmul.mubr.f32.gmra.mrb[0].mxu0 %v47
  %v166 = vpop.f32.mrb[0].mxu0
  %v167 = vadd.f32 %v41, %v166
  %v168 = vpop.f32.mrb[0].mxu0
  %169 = vmatprep.mubr.f32.mxu0 0.0
  %170 = vmatmul.mubr.f32.gmra.mrb[0].mxu0 %v50
  %v171 = vpop.f32.mrb[0].mxu0
  %v172 = vadd.f32 %v41, %v171
  %v173 = vpop.f32.mrb[0].mxu0
  %174 = vmatprep.mubr.f32.mxu0 0.0
  %175 = vmatmul.mubr.f32.gmra.mrb[0].mxu0 %v53
  %v176 = vpop.f32.mrb[0].mxu0
  %v177 = vadd.f32 %v41, %v176
  %v178 = vpop.f32.mrb[0].mxu0
  %179 = vmatprep.mubr.f32.mxu0 0.0
  %180 = vmatmul.mubr.f32.gmra.mrb[0].mxu0 %v56
  %v181 = vpop.f32.mrb[0].mxu0
  %v182 = vadd.f32 %v41, %v181
  %v183 = vpop.f32.mrb[0].mxu0
  %184 = vmatprep.mubr.f32.mxu0 0.0
  %185 = vmatmul.mubr.f32.gmra.mrb[0].mxu0 %v59
  %v186 = vpop.f32.mrb[0].mxu0
  %v187 = vadd.f32 %v41, %v186
  %v188 = vpop.f32.mrb[0].mxu0
  %189 = vmatprep.mubr.f32.mxu0 0.0
  %190 = vmatmul.mubr.f32.gmra.mrb[0].mxu0 %v62
  %v191 = vpop.f32.mrb[0].mxu0
  %v192 = vadd.f32 %v41, %v191
  %v193 = vpop.f32.mrb[0].mxu0
  %194 = vmatprep.mubr.f32.mxu0 0.0
  %195 = vmatmul.mubr.f32.gmra.mrb[0].mxu0 %v65
  %v196 = vpop.f32.mrb[0].mxu0
  %v197 = vadd.f32 %v41, %v196
  %v198 = vpop.f32.mrb[0].mxu0
  %199 = vmatprep.mubr.f32.mxu0 0.0
  %200 = vmatmul.mubr.f32.gmra.mrb[0].mxu0 %v68
  %v201 = vpop.f32.mrb[0].mxu0
  %v202 = vadd.f32 %v41, %v201
  %v203 = vpop.f32.mrb[0].mxu0
  %204 = vmatprep.mubr.f32.mxu0 0.0
  %205 = vmatmul.mubr.f32.gmra.mrb[0].mxu0 %v71
  %v206 = vpop.f32.mrb[0].mxu0
  %v207 = vadd.f32 %v41, %v206
  %v208 = vpop.f32.mrb[0].mxu0
  %209 = vmatprep.mubr.f32.mxu0 0.0
  %210 = vmatmul.mubr.f32.gmra.mrb[0].mxu0 %v74
  %v211 = vpop.f32.mrb[0].mxu0
  %v212 = vadd.f32 %v41, %v211
  %v213 = vpop.f32.mrb[0].mxu0
  %214 = vmatprep.mubr.f32.mxu0 0.0
  %215 = vmatmul.mubr.f32.gmra.mrb[0].mxu0 %v77
  %v216 = vpop.f32.mrb[0].mxu0
  %v217 = vadd.f32 %v41, %v216
  %v218 = vpop.f32.mrb[0].mxu0
  %219 = vmatprep.mubr.f32.mxu0 0.0
  %220 = vmatmul.mubr.f32.gmra.mrb[0].mxu0 %v80
  %v221 = vpop.f32.mrb[0].mxu0
  %v222 = vadd.f32 %v41, %v221
  %v223 = vpop.f32.mrb[0].mxu0
  %224 = vmatprep.mubr.f32.mxu0 0.0
  %225 = vmatmul.mubr.f32.gmra.mrb[0].mxu0 %v83
  %v226 = vpop.f32.mrb[0].mxu0
  %v227 = vadd.f32 %v41, %v226
  %v228 = vpop.f32.mrb[0].mxu0
  %229 = vmatprep.mubr.f32.mxu0 0.0
  %230 = vmatmul.mubr.f32.gmra.mrb[0].mxu0 %v86
  %v231 = vpop.f32.mrb[0].mxu0
  %v232 = vadd.f32 %v41, %v231
  %v233 = vpop.f32.mrb[0].mxu0
  %234 = vmatprep.mubr.f32.mxu0 0.0
  %235 = vmatmul.mubr.f32.gmra.mrb[0].mxu0 %v89
  %v236 = vpop.f32.mrb[0].mxu0
  %v237 = vadd.f32 %v41, %v236
  %v238 = vpop.f32.mrb[0].mxu0
  %239 = vdwg.mxu0
  %v240 = vmax.f32 %v162, 0.0
  %v241 = vmax.f32 %v167, 0.0
  %v242 = vmax.f32 %v172, 0.0
  %v243 = vmax.f32 %v177, 0.0
  %v244 = vmax.f32 %v182, 0.0
  %v245 = vmax.f32 %v187, 0.0
  %v246 = vmax.f32 %v192, 0.0
  %v247 = vmax.f32 %v197, 0.0
  %v248 = vmax.f32 %v202, 0.0
  %v249 = vmax.f32 %v207, 0.0
  %v250 = vmax.f32 %v212, 0.0
  %v251 = vmax.f32 %v217, 0.0
  %v252 = vmax.f32 %v222, 0.0
  %v253 = vmax.f32 %v227, 0.0
  %v254 = vmax.f32 %v232, 0.0
  %v255 = vmax.f32 %v237, 0.0
  %v256 = vmax.f32 %v240, %v244
  %v257 = vmax.f32 %v241, %v245
  %v258 = vmax.f32 %v242, %v246
  %v259 = vmax.f32 %v243, %v247
  %v260 = vmax.f32 %v248, %v252
  %v261 = vmax.f32 %v249, %v253
  %v262 = vmax.f32 %v250, %v254
  %v263 = vmax.f32 %v251, %v255
  %v264 = vmax.f32 %v256, %v260
  %v265 = vmax.f32 %v257, %v261
  %v266 = vmax.f32 %v258, %v262
  %v267 = vmax.f32 %v259, %v263
  %vm268 = vcmask 523264
  %269 = vst.msk [vmem:[#allocation2] sm:$0xff] %vm268, 0.0
  %270 = vst.msk [vmem:[#allocation2 + $0x8] sm:$0xff] %vm268, 0.0
  %271 = vst.msk [vmem:[#allocation2 + $0x10] sm:$0xff] %vm268, 0.0
  %272 = vst.msk [vmem:[#allocation2 + $0x18] sm:$0xff] %vm268, 0.0
  %273 = vst.msk [vmem:[#allocation2 + $0x20] sm:$0xff] %vm268, 0.0
  %274 = vst.msk [vmem:[#allocation2 + $0x28] sm:$0xff] %vm268, 0.0
  %275 = vst.msk [vmem:[#allocation2 + $0x30] sm:$0xff] %vm268, 0.0
  %276 = vst.msk [vmem:[#allocation2 + $0x38] sm:$0xff] %vm268, 0.0
  %277 = vst.msk [vmem:[#allocation2 + $0x40] sm:$0xff] %vm268, 0.0
  %278 = vst.msk [vmem:[#allocation2 + $0xe] sm:$0xff] %vm268, %v264
  %279 = vst.msk [vmem:[#allocation2 + $0x1a] sm:$0xff] %vm268, %v265
  %280 = vst.msk [vmem:[#allocation2 + $0x26] sm:$0xff] %vm268, %v266
  %281 = vst.msk [vmem:[#allocation2 + $0x32] sm:$0xff] %vm268, %v267
  %v282 = vld [vmem:[#allocation2] sm:$0xff]
  %v283 = vld [vmem:[#allocation2 + $0x8] sm:$0xff]
  %v284 = vld [vmem:[#allocation2 + $0x10] sm:$0xff]
  %v285 = vld [vmem:[#allocation2 + $0x18] sm:$0xff]
  %v286 = vld [vmem:[#allocation2 + $0x20] sm:$0xff]
  %v287 = vld [vmem:[#allocation2 + $0x28] sm:$0xf]
  %288 = vst.msk [vmem:[#allocation3] sm:$0xff] %vm268, %v282
  %289 = vst.msk [vmem:[#allocation3 + $0x28] sm:$0xff] %vm268, %v283
  %290 = vst.msk [vmem:[#allocation3 + $0x50] sm:$0xff] %vm268, %v284
  %291 = vst.msk [vmem:[#allocation3 + $0x78] sm:$0xff] %vm268, %v285
  %292 = vst.msk [vmem:[#allocation3 + $0xa0] sm:$0xff] %vm268, %v286
  %vm293 = vcmask 519168
  %294 = vst.msk [vmem:[#allocation3 + $0xc8] sm:$0xf] %vm293, %v287
  %v295 = vld [vmem:[#allocation2 + $0x2] sm:$0xff]
  %v296 = vld [vmem:[#allocation2 + $0xa] sm:$0xff]
  %v297 = vld [vmem:[#allocation2 + $0x12] sm:$0xff]
  %v298 = vld [vmem:[#allocation2 + $0x1a] sm:$0xff]
  %v299 = vld [vmem:[#allocation2 + $0x22] sm:$0xff]
  %v300 = vld [vmem:[#allocation2 + $0x2a] sm:$0xf]
  %307 = vrot.lane.b32.xlu0 %v295, 64
  %v308 = vpop.permute.xlu0 %307
  %309 = vrot.lane.b32.xlu0 %v296, 64
  %v310 = vpop.permute.xlu0 %309
  %311 = vrot.lane.b32.xlu0 %v297, 64
  %v312 = vpop.permute.xlu0 %311
  %313 = vrot.lane.b32.xlu0 %v298, 64
  %v314 = vpop.permute.xlu0 %313
  %315 = vrot.lane.b32.xlu0 %v299, 64
  %v316 = vpop.permute.xlu0 %315
  %317 = vrot.lane.b32.xlu0 %v300, 64
  %v318 = vpop.permute.xlu0 %317
  %vm325 = vcmask 1048064
  %326 = vst.msk [vmem:[#allocation3] sm:$0xff] %vm325, %v308
  %327 = vst.msk [vmem:[#allocation3 + $0x28] sm:$0xff] %vm325, %v310
  %328 = vst.msk [vmem:[#allocation3 + $0x50] sm:$0xff] %vm325, %v312
  %329 = vst.msk [vmem:[#allocation3 + $0x78] sm:$0xff] %vm325, %v314
  %330 = vst.msk [vmem:[#allocation3 + $0xa0] sm:$0xff] %vm325, %v316
  %vm331 = vcmask 1043968
  %332 = vst.msk [vmem:[#allocation3 + $0xc8] sm:$0xf] %vm331, %v318
  %v333 = vld [vmem:[#allocation2 + $0x4] sm:$0xff]
  %v334 = vld [vmem:[#allocation2 + $0xc] sm:$0xff]
  %v335 = vld [vmem:[#allocation2 + $0x14] sm:$0xff]
  %v336 = vld [vmem:[#allocation2 + $0x1c] sm:$0xff]
  %v337 = vld [vmem:[#allocation2 + $0x24] sm:$0xff]
  %v338 = vld [vmem:[#allocation2 + $0x2c] sm:$0xf]
  %339 = vst.msk [vmem:[#allocation3 + $0x8] sm:$0xff] %vm268, %v333
  %340 = vst.msk [vmem:[#allocation3 + $0x30] sm:$0xff] %vm268, %v334
  %341 = vst.msk [vmem:[#allocation3 + $0x58] sm:$0xff] %vm268, %v335
  %342 = vst.msk [vmem:[#allocation3 + $0x80] sm:$0xff] %vm268, %v336
  %343 = vst.msk [vmem:[#allocation3 + $0xa8] sm:$0xff] %vm268, %v337
  %344 = vst.msk [vmem:[#allocation3 + $0xd0] sm:$0xf] %vm293, %v338
  %v345 = vld [vmem:[#allocation2 + $0xc] sm:$0xff]
  %v346 = vld [vmem:[#allocation2 + $0x14] sm:$0xff]
  %v347 = vld [vmem:[#allocation2 + $0x1c] sm:$0xff]
  %v348 = vld [vmem:[#allocation2 + $0x24] sm:$0xff]
  %v349 = vld [vmem:[#allocation2 + $0x2c] sm:$0xff]
  %v350 = vld [vmem:[#allocation2 + $0x34] sm:$0xf]
  %357 = vrot.lane.b32.xlu0 %v345, 64
  %v358 = vpop.permute.xlu0 %357
  %359 = vrot.lane.b32.xlu0 %v346, 64
  %v360 = vpop.permute.xlu0 %359
  %361 = vrot.lane.b32.xlu0 %v347, 64
  %v362 = vpop.permute.xlu0 %361
  %363 = vrot.lane.b32.xlu0 %v348, 64
  %v364 = vpop.permute.xlu0 %363
  %365 = vrot.lane.b32.xlu0 %v349, 64
  %v366 = vpop.permute.xlu0 %365
  %367 = vrot.lane.b32.xlu0 %v350, 64
  %v368 = vpop.permute.xlu0 %367
  %375 = vst.msk [vmem:[#allocation3 + $0x8] sm:$0xff] %vm325, %v358
  %376 = vst.msk [vmem:[#allocation3 + $0x30] sm:$0xff] %vm325, %v360
  %377 = vst.msk [vmem:[#allocation3 + $0x58] sm:$0xff] %vm325, %v362
  %378 = vst.msk [vmem:[#allocation3 + $0x80] sm:$0xff] %vm325, %v364
  %379 = vst.msk [vmem:[#allocation3 + $0xa8] sm:$0xff] %vm325, %v366
  %380 = vst.msk [vmem:[#allocation3 + $0xd0] sm:$0xf] %vm331, %v368
  %v381 = vld [vmem:[#allocation2 + $0xe] sm:$0xff]
  %v382 = vld [vmem:[#allocation2 + $0x16] sm:$0xff]
  %v383 = vld [vmem:[#allocation2 + $0x1e] sm:$0xff]
  %v384 = vld [vmem:[#allocation2 + $0x26] sm:$0xff]
  %v385 = vld [vmem:[#allocation2 + $0x2e] sm:$0xff]
  %v386 = vld [vmem:[#allocation2 + $0x36] sm:$0xf]
  %387 = vst.msk [vmem:[#allocation3 + $0x10] sm:$0xff] %vm268, %v381
  %388 = vst.msk [vmem:[#allocation3 + $0x38] sm:$0xff] %vm268, %v382
  %389 = vst.msk [vmem:[#allocation3 + $0x60] sm:$0xff] %vm268, %v383
  %390 = vst.msk [vmem:[#allocation3 + $0x88] sm:$0xff] %vm268, %v384
  %391 = vst.msk [vmem:[#allocation3 + $0xb0] sm:$0xff] %vm268, %v385
  %392 = vst.msk [vmem:[#allocation3 + $0xd8] sm:$0xf] %vm293, %v386
  %v393 = vld [vmem:[#allocation2 + $0x10] sm:$0xff]
  %v394 = vld [vmem:[#allocation2 + $0x18] sm:$0xff]
  %v395 = vld [vmem:[#allocation2 + $0x20] sm:$0xff]
  %v396 = vld [vmem:[#allocation2 + $0x28] sm:$0xff]
  %v397 = vld [vmem:[#allocation2 + $0x30] sm:$0xff]
  %v398 = vld [vmem:[#allocation2 + $0x38] sm:$0xf]
  %405 = vrot.lane.b32.xlu0 %v393, 64
  %v406 = vpop.permute.xlu0 %405
  %407 = vrot.lane.b32.xlu0 %v394, 64
  %v408 = vpop.permute.xlu0 %407
  %409 = vrot.lane.b32.xlu0 %v395, 64
  %v410 = vpop.permute.xlu0 %409
  %411 = vrot.lane.b32.xlu0 %v396, 64
  %v412 = vpop.permute.xlu0 %411
  %413 = vrot.lane.b32.xlu0 %v397, 64
  %v414 = vpop.permute.xlu0 %413
  %415 = vrot.lane.b32.xlu0 %v398, 64
  %v416 = vpop.permute.xlu0 %415
  %423 = vst.msk [vmem:[#allocation3 + $0x10] sm:$0xff] %vm325, %v406
  %424 = vst.msk [vmem:[#allocation3 + $0x38] sm:$0xff] %vm325, %v408
  %425 = vst.msk [vmem:[#allocation3 + $0x60] sm:$0xff] %vm325, %v410
  %426 = vst.msk [vmem:[#allocation3 + $0x88] sm:$0xff] %vm325, %v412
  %427 = vst.msk [vmem:[#allocation3 + $0xb0] sm:$0xff] %vm325, %v414
  %428 = vst.msk [vmem:[#allocation3 + $0xd8] sm:$0xf] %vm331, %v416
  %v429 = vld [vmem:[#allocation2 + $0x18] sm:$0xff]
  %v430 = vld [vmem:[#allocation2 + $0x20] sm:$0xff]
  %v431 = vld [vmem:[#allocation2 + $0x28] sm:$0xff]
  %v432 = vld [vmem:[#allocation2 + $0x30] sm:$0xff]
  %v433 = vld [vmem:[#allocation2 + $0x38] sm:$0xff]
  %v434 = vld [vmem:[#allocation2 + $0x40] sm:$0xf]
  %435 = vst.msk [vmem:[#allocation3 + $0x18] sm:$0xff] %vm268, %v429
  %436 = vst.msk [vmem:[#allocation3 + $0x40] sm:$0xff] %vm268, %v430
  %437 = vst.msk [vmem:[#allocation3 + $0x68] sm:$0xff] %vm268, %v431
  %438 = vst.msk [vmem:[#allocation3 + $0x90] sm:$0xff] %vm268, %v432
  %439 = vst.msk [vmem:[#allocation3 + $0xb8] sm:$0xff] %vm268, %v433
  %440 = vst.msk [vmem:[#allocation3 + $0xe0] sm:$0xf] %vm293, %v434
  %v441 = vld [vmem:[#allocation2 + $0x1a] sm:$0xff]
  %v442 = vld [vmem:[#allocation2 + $0x22] sm:$0xff]
  %v443 = vld [vmem:[#allocation2 + $0x2a] sm:$0xff]
  %v444 = vld [vmem:[#allocation2 + $0x32] sm:$0xff]
  %v445 = vld [vmem:[#allocation2 + $0x3a] sm:$0xff]
  %v446 = vld [vmem:[#allocation2 + $0x42] sm:$0xf]
  %453 = vrot.lane.b32.xlu0 %v441, 64
  %v454 = vpop.permute.xlu0 %453
  %455 = vrot.lane.b32.xlu0 %v442, 64
  %v456 = vpop.permute.xlu0 %455
  %457 = vrot.lane.b32.xlu0 %v443, 64
  %v458 = vpop.permute.xlu0 %457
  %459 = vrot.lane.b32.xlu0 %v444, 64
  %v460 = vpop.permute.xlu0 %459
  %461 = vrot.lane.b32.xlu0 %v445, 64
  %v462 = vpop.permute.xlu0 %461
  %463 = vrot.lane.b32.xlu0 %v446, 64
  %v464 = vpop.permute.xlu0 %463
  %471 = vst.msk [vmem:[#allocation3 + $0x18] sm:$0xff] %vm325, %v454
  %472 = vst.msk [vmem:[#allocation3 + $0x40] sm:$0xff] %vm325, %v456
  %473 = vst.msk [vmem:[#allocation3 + $0x68] sm:$0xff] %vm325, %v458
  %474 = vst.msk [vmem:[#allocation3 + $0x90] sm:$0xff] %vm325, %v460
  %475 = vst.msk [vmem:[#allocation3 + $0xb8] sm:$0xff] %vm325, %v462
  %476 = vst.msk [vmem:[#allocation3 + $0xe0] sm:$0xf] %vm331, %v464
  %v477 = vld [vmem:[#allocation2 + $0x1c] sm:$0xff]
  %v478 = vld [vmem:[#allocation2 + $0x24] sm:$0xff]
  %v479 = vld [vmem:[#allocation2 + $0x2c] sm:$0xff]
  %v480 = vld [vmem:[#allocation2 + $0x34] sm:$0xff]
  %v481 = vld [vmem:[#allocation2 + $0x3c] sm:$0xff]
  %v482 = vld [vmem:[#allocation2 + $0x44] sm:$0xf]
  %483 = vst.msk [vmem:[#allocation3 + $0x20] sm:$0xff] %vm268, %v477
  %484 = vst.msk [vmem:[#allocation3 + $0x48] sm:$0xff] %vm268, %v478
  %485 = vst.msk [vmem:[#allocation3 + $0x70] sm:$0xff] %vm268, %v479
  %486 = vst.msk [vmem:[#allocation3 + $0x98] sm:$0xff] %vm268, %v480
  %487 = vst.msk [vmem:[#allocation3 + $0xc0] sm:$0xff] %vm268, %v481
  %488 = vst.msk [vmem:[#allocation3 + $0xe8] sm:$0xf] %vm293, %v482
  %v489 = vld [vmem:[#allocation3] sm:$0xff]
  %v490 = vld [vmem:[#allocation3 + $0x8] sm:$0xff]
  %v491 = vld [vmem:[#allocation3 + $0x10] sm:$0xff]
  %v492 = vld [vmem:[#allocation3 + $0x18] sm:$0xff]
  %v493 = vld [vmem:[#allocation3 + $0x20] sm:$0xff]
  %v494 = vld [vmem:[#allocation3 + $0x28] sm:$0xff]
  %v495 = vld [vmem:[#allocation3 + $0x30] sm:$0xff]
  %v496 = vld [vmem:[#allocation3 + $0x38] sm:$0xff]
  %v497 = vld [vmem:[#allocation3 + $0x40] sm:$0xff]
  %v498 = vld [vmem:[#allocation3 + $0x48] sm:$0xff]
  %v499 = vld [vmem:[#allocation3 + $0x50] sm:$0xff]
  %v500 = vld [vmem:[#allocation3 + $0x58] sm:$0xff]
  %v501 = vld [vmem:[#allocation3 + $0x60] sm:$0xff]
  %v502 = vld [vmem:[#allocation3 + $0x68] sm:$0xff]
  %v503 = vld [vmem:[#allocation3 + $0x70] sm:$0xff]
  %v504 = vld [vmem:[#allocation3 + $0x78] sm:$0xff]
  %v505 = vld [vmem:[#allocation3 + $0x80] sm:$0xff]
  %v506 = vld [vmem:[#allocation3 + $0x88] sm:$0xff]
  %v507 = vld [vmem:[#allocation3 + $0x90] sm:$0xff]
  %v508 = vld [vmem:[#allocation3 + $0x98] sm:$0xff]
  %v509 = vld [vmem:[#allocation3 + $0xa0] sm:$0xff]
  %v510 = vld [vmem:[#allocation3 + $0xa8] sm:$0xff]
  %v511 = vld [vmem:[#allocation3 + $0xb0] sm:$0xff]
  %v512 = vld [vmem:[#allocation3 + $0xb8] sm:$0xff]
  %v513 = vld [vmem:[#allocation3 + $0xc0] sm:$0xff]
  %v514 = vld [vmem:[#allocation3 + $0xc8] sm:$0xf]
  %v515 = vld [vmem:[#allocation3 + $0xd0] sm:$0xf]
  %v516 = vld [vmem:[#allocation3 + $0xd8] sm:$0xf]
  %v517 = vld [vmem:[#allocation3 + $0xe0] sm:$0xf]
  %v518 = vld [vmem:[#allocation3 + $0xe8] sm:$0xf]
  %v519 = vld [vmem:[%s1 + $0x58] sm:$0xff]
  %v520 = vld [vmem:[%s1 + $0x60] sm:$0xff]
  %v521 = vld [vmem:[%s1 + $0x68] sm:$0xff]
  %v522 = vld [vmem:[%s1 + $0x70] sm:$0xff]
  %v523 = vld [vmem:[%s1 + $0x78] sm:$0xff]
  %v524 = vld [vmem:[%s1 + $0x80] sm:$0xff]
  %v525 = vld [vmem:[%s1 + $0x88] sm:$0xff]
  %v526 = vld [vmem:[%s1 + $0x90] sm:$0xff]
  %v527 = vld [vmem:[%s1 + $0x98] sm:$0xff]
  %v528 = vld [vmem:[%s1 + $0xa0] sm:$0xff]
  %v529 = vld [vmem:[%s1 + $0xa8] sm:$0xff]
  %v530 = vld [vmem:[%s1 + $0xb0] sm:$0xff]
  %v531 = vld [vmem:[%s1 + $0xb8] sm:$0xff]
  %v532 = vld [vmem:[%s1 + $0xc0] sm:$0xff]
  %v533 = vld [vmem:[%s1 + $0xc8] sm:$0xff]
  %v534 = vld [vmem:[%s1 + $0xd0] sm:$0xff]
  %v535 = vld [vmem:[%s1 + $0xd8] sm:$0xff]
  %v536 = vld [vmem:[%s1 + $0xe0] sm:$0xff]
  %v537 = vld [vmem:[%s1 + $0xe8] sm:$0xff]
  %v538 = vld [vmem:[%s1 + $0xf0] sm:$0xff]
  %v539 = vld [vmem:[%s1 + $0xf8] sm:$0xff]
  %v540 = vld [vmem:[%s1 + $0x100] sm:$0xff]
  %v541 = vld [vmem:[%s1 + $0x108] sm:$0xff]
  %v542 = vld [vmem:[%s1 + $0x110] sm:$0xff]
  %v543 = vld [vmem:[%s1 + $0x118] sm:$0xff]
  %v544 = vld [vmem:[%s1 + $0x120] sm:$0xff]
  %v545 = vld [vmem:[%s1 + $0x128] sm:$0xff]
  %v546 = vld [vmem:[%s1 + $0x130] sm:$0xff]
  %v547 = vld [vmem:[%s1 + $0x138] sm:$0xff]
  %v548 = vld [vmem:[%s1 + $0x140] sm:$0xff]
  %v549 = vld [vmem:[%s1 + $0x148] sm:$0xff]
  %v550 = vld [vmem:[%s1 + $0x150] sm:$0xff]
  %v551 = vld [vmem:[%s1 + $0x158] sm:$0xff]
  %v552 = vld [vmem:[%s1 + $0x160] sm:$0xff]
  %v553 = vld [vmem:[%s1 + $0x168] sm:$0xff]
  %v554 = vld [vmem:[%s1 + $0x170] sm:$0xff]
  %v555 = vld [vmem:[%s1 + $0x178] sm:$0xff]
  %v556 = vld [vmem:[%s1 + $0x180] sm:$0xff]
  %v557 = vld [vmem:[%s1 + $0x188] sm:$0xff]
  %v558 = vld [vmem:[%s1 + $0x190] sm:$0xff]
  %v559 = vld [vmem:[%s1 + $0x198] sm:$0xff]
  %v560 = vld [vmem:[%s1 + $0x1a0] sm:$0xff]
  %v561 = vld [vmem:[%s1 + $0x1a8] sm:$0xff]
  %v562 = vld [vmem:[%s1 + $0x1b0] sm:$0xff]
  %v563 = vld [vmem:[%s1 + $0x1b8] sm:$0xff]
  %v564 = vld [vmem:[%s1 + $0x1c0] sm:$0xff]
  %v565 = vld [vmem:[%s1 + $0x1c8] sm:$0xff]
  %v566 = vld [vmem:[%s1 + $0x1d0] sm:$0xff]
  %v567 = vld [vmem:[%s1 + $0x1d8] sm:$0xff]
  %v568 = vld [vmem:[%s1 + $0x1e0] sm:$0xff]
  %v569 = vld [vmem:[%s1 + $0x1e8] sm:$0xff]
  %v570 = vld [vmem:[%s1 + $0x1f0] sm:$0xff]
  %v571 = vld [vmem:[%s1 + $0x1f8] sm:$0xff]
  %v572 = vld [vmem:[%s1 + $0x200] sm:$0xff]
  %v573 = vld [vmem:[%s1 + $0x208] sm:$0xff]
  %v574 = vld [vmem:[%s1 + $0x210] sm:$0xff]
  %v575 = vld [vmem:[%s1 + $0x218] sm:$0xff]
  %v576 = vld [vmem:[%s1 + $0x220] sm:$0xff]
  %v577 = vld [vmem:[%s1 + $0x228] sm:$0xff]
  %v578 = vld [vmem:[%s1 + $0x230] sm:$0xff]
  %v579 = vld [vmem:[%s1 + $0x238] sm:$0xff]
  %v580 = vld [vmem:[%s1 + $0x240] sm:$0xff]
  %v581 = vld [vmem:[%s1 + $0x248] sm:$0xff]
  %v582 = vld [vmem:[%s1 + $0x250] sm:$0xff]
  %v583 = vld [vmem:[%s1 + $0x258] sm:$0xff]
  %v584 = vld [vmem:[%s1 + $0x260] sm:$0xff]
  %v585 = vld [vmem:[%s1 + $0x268] sm:$0xff]
  %v586 = vld [vmem:[%s1 + $0x270] sm:$0xff]
  %v587 = vld [vmem:[%s1 + $0x278] sm:$0xff]
  %v588 = vld [vmem:[%s1 + $0x280] sm:$0xff]
  %v589 = vld [vmem:[%s1 + $0x288] sm:$0xff]
  %v590 = vld [vmem:[%s1 + $0x290] sm:$0xff]
  %v591 = vld [vmem:[%s1 + $0x298] sm:$0x1]
  %v592 = vlaneseq
  %v593 = vshrl.u32 %v592, 7
  %v594 = vsub.s32 0, %v593
  %v595 = vrot.slane %v591, %v594
  %v597 = vsel %vm268, %v493, 0
  %v600 = vsel %vm268, %v498, 0
  %v603 = vsel %vm268, %v503, 0
  %v606 = vsel %vm268, %v508, 0
  %v609 = vsel %vm268, %v513, 0
  %v612 = vsel %vm268, %v518, 0
  %614 = vmatprep.subr.mxu0 0.0
  %615 = vmatpush1.msra.mxu0 %v519
  %616 = vmatprep.subr.mxu0 0.0
  %617 = vmatpush1.msra.mxu0 %v520
  %618 = vmatprep.subr.mxu0 0.0
  %619 = vmatpush1.msra.mxu0 %v521
  %620 = vmatprep.subr.mxu0 0.0
  %621 = vmatpush1.msra.mxu0 %v522
  %622 = vmatprep.subr.mxu0 0.0
  %623 = vmatpush1.msra.mxu0 %v523
  %624 = vmatprep.subr.mxu0 0.0
  %625 = vmatpush1.msra.mxu0 %v524
  %626 = vmatprep.subr.mxu0 0.0
  %627 = vmatpush1.msra.mxu0 %v525
  %628 = vmatprep.subr.mxu0 0.0
  %629 = vmatpush1.msra.mxu0 %v526
  %630 = vmatprep.subr.mxu0 0.0
  %631 = vmatpush1.msra.mxu0 %v527
  %632 = vmatprep.subr.mxu0 0.0
  %633 = vmatpush1.msra.mxu0 %v528
  %634 = vmatprep.subr.mxu0 0.0
  %635 = vmatpush1.msra.mxu0 %v529
  %636 = vmatprep.subr.mxu0 0.0
  %637 = vmatpush1.msra.mxu0 %v530
  %638 = vmatprep.subr.mxu0 0.0
  %639 = vmatpush1.msra.mxu0 %v531
  %640 = vmatprep.subr.mxu0 0.0
  %641 = vmatpush1.msra.mxu0 %v532
  %642 = vmatprep.subr.mxu0 0.0
  %643 = vmatpush1.msra.mxu0 %v533
  %644 = vmatprep.subr.mxu0 0.0
  %645 = vmatpush1.msra.mxu0 %v534
  %646 = vmatprep.subr.mxu0 0.0
  %647 = vmatpush1.msra.mxu0 %v535
  %648 = vmatprep.subr.mxu0 0.0
  %649 = vmatpush1.msra.mxu0 %v536
  %650 = vmatprep.subr.mxu0 0.0
  %651 = vmatpush1.msra.mxu0 %v537
  %652 = vmatprep.subr.mxu0 0.0
  %653 = vmatpush1.msra.mxu0 %v538
  %654 = vmatprep.subr.mxu0 0.0
  %655 = vmatpush1.msra.mxu0 %v539
  %656 = vmatprep.subr.mxu0 0.0
  %657 = vmatpush1.msra.mxu0 %v540
  %658 = vmatprep.subr.mxu0 0.0
  %659 = vmatpush1.msra.mxu0 %v541
  %660 = vmatprep.subr.mxu0 0.0
  %661 = vmatpush1.msra.mxu0 %v542
  %662 = vmatprep.subr.mxu0 0.0
  %663 = vmatpush1.msra.mxu0 %v543
  %664 = vmatprep.subr.mxu0 0.0
  %665 = vmatpush1.msra.mxu0 %v544
  %666 = vmatprep.subr.mxu0 0.0
  %667 = vmatpush1.msra.mxu0 %v545
  %668 = vmatprep.subr.mxu0 0.0
  %669 = vmatpush1.msra.mxu0 %v546
  %670 = vmatprep.subr.mxu0 0.0
  %671 = vmatpush1.msra.mxu0 %v547
  %672 = vmatprep.subr.mxu0 0.0
  %673 = vmatpush1.msra.mxu0 %v548
  %674 = vmatprep.subr.mxu0 0.0
  %675 = vmatpush1.msra.mxu0 %v549
  %676 = vmatprep.subr.mxu0 0.0
  %677 = vmatpush1.msra.mxu0 %v550
  %678 = vmatprep.mubr.f32.mxu0 %v490
  %679 = vmatmul.mubr.f32.gmra.mrb[0].mxu0 %v489
  %v680 = vpop.f32.mrb[0].mxu0
  %v681 = vadd.f32 %v595, %v680
  %v682 = vpop.f32.mrb[0].mxu0
  %683 = vmatprep.mubr.f32.mxu0 %v495
  %684 = vmatmul.mubr.f32.gmra.mrb[0].mxu0 %v494
  %v685 = vpop.f32.mrb[0].mxu0
  %v686 = vadd.f32 %v595, %v685
  %v687 = vpop.f32.mrb[0].mxu0
  %688 = vmatprep.mubr.f32.mxu0 %v500
  %689 = vmatmul.mubr.f32.gmra.mrb[0].mxu0 %v499
  %v690 = vpop.f32.mrb[0].mxu0
  %v691 = vadd.f32 %v595, %v690
  %v692 = vpop.f32.mrb[0].mxu0
  %693 = vmatprep.mubr.f32.mxu0 %v505
  %694 = vmatmul.mubr.f32.gmra.mrb[0].mxu0 %v504
  %v695 = vpop.f32.mrb[0].mxu0
  %v696 = vadd.f32 %v595, %v695
  %v697 = vpop.f32.mrb[0].mxu0
  %698 = vmatprep.mubr.f32.mxu0 %v510
  %699 = vmatmul.mubr.f32.gmra.mrb[0].mxu0 %v509
  %v700 = vpop.f32.mrb[0].mxu0
  %v701 = vadd.f32 %v595, %v700
  %v702 = vpop.f32.mrb[0].mxu0
  %703 = vmatprep.mubr.f32.mxu0 %v515
  %704 = vmatmul.mubr.f32.gmra.mrb[0].mxu0 %v514
  %v705 = vpop.f32.mrb[0].mxu0
  %v706 = vadd.f32 %v595, %v705
  %v707 = vpop.f32.mrb[0].mxu0
  %708 = vdwg.mxu0
  %709 = vmatprep.subr.mxu0 0.0
  %710 = vmatpush1.msra.mxu0 %v551
  %711 = vmatprep.subr.mxu0 0.0
  %712 = vmatpush1.msra.mxu0 %v552
  %713 = vmatprep.subr.mxu0 0.0
  %714 = vmatpush1.msra.mxu0 %v553
  %715 = vmatprep.subr.mxu0 0.0
  %716 = vmatpush1.msra.mxu0 %v554
  %717 = vmatprep.subr.mxu0 0.0
  %718 = vmatpush1.msra.mxu0 %v555
  %719 = vmatprep.subr.mxu0 0.0
  %720 = vmatpush1.msra.mxu0 %v556
  %721 = vmatprep.subr.mxu0 0.0
  %722 = vmatpush1.msra.mxu0 %v557
  %723 = vmatprep.subr.mxu0 0.0
  %724 = vmatpush1.msra.mxu0 %v558
  %725 = vmatprep.subr.mxu0 0.0
  %726 = vmatpush1.msra.mxu0 %v559
  %727 = vmatprep.subr.mxu0 0.0
  %728 = vmatpush1.msra.mxu0 %v560
  %729 = vmatprep.subr.mxu0 0.0
  %730 = vmatpush1.msra.mxu0 %v561
  %731 = vmatprep.subr.mxu0 0.0
  %732 = vmatpush1.msra.mxu0 %v562
  %733 = vmatprep.subr.mxu0 0.0
  %734 = vmatpush1.msra.mxu0 %v563
  %735 = vmatprep.subr.mxu0 0.0
  %736 = vmatpush1.msra.mxu0 %v564
  %737 = vmatprep.subr.mxu0 0.0
  %738 = vmatpush1.msra.mxu0 %v565
  %739 = vmatprep.subr.mxu0 0.0
  %740 = vmatpush1.msra.mxu0 %v566
  %741 = vmatprep.subr.mxu0 0.0
  %742 = vmatpush1.msra.mxu0 %v567
  %743 = vmatprep.subr.mxu0 0.0
  %744 = vmatpush1.msra.mxu0 %v568
  %745 = vmatprep.subr.mxu0 0.0
  %746 = vmatpush1.msra.mxu0 %v569
  %747 = vmatprep.subr.mxu0 0.0
  %748 = vmatpush1.msra.mxu0 %v570
  %749 = vmatprep.subr.mxu0 0.0
  %750 = vmatpush1.msra.mxu0 %v571
  %751 = vmatprep.subr.mxu0 0.0
  %752 = vmatpush1.msra.mxu0 %v572
  %753 = vmatprep.subr.mxu0 0.0
  %754 = vmatpush1.msra.mxu0 %v573
  %755 = vmatprep.subr.mxu0 0.0
  %756 = vmatpush1.msra.mxu0 %v574
  %757 = vmatprep.subr.mxu0 0.0
  %758 = vmatpush1.msra.mxu0 %v575
  %759 = vmatprep.subr.mxu0 0.0
  %760 = vmatpush1.msra.mxu0 %v576
  %761 = vmatprep.subr.mxu0 0.0
  %762 = vmatpush1.msra.mxu0 %v577
  %763 = vmatprep.subr.mxu0 0.0
  %764 = vmatpush1.msra.mxu0 %v578
  %765 = vmatprep.subr.mxu0 0.0
  %766 = vmatpush1.msra.mxu0 %v579
  %767 = vmatprep.subr.mxu0 0.0
  %768 = vmatpush1.msra.mxu0 %v580
  %769 = vmatprep.subr.mxu0 0.0
  %770 = vmatpush1.msra.mxu0 %v581
  %771 = vmatprep.subr.mxu0 0.0
  %772 = vmatpush1.msra.mxu0 %v582
  %773 = vmatprep.mubr.f32.mxu0 %v492
  %774 = vmatmul.mubr.f32.gmra.mrb[0].mxu0 %v491
  %v775 = vpop.f32.mrb[0].mxu0
  %v776 = vadd.f32 %v681, %v775
  %v777 = vpop.f32.mrb[0].mxu0
  %778 = vmatprep.mubr.f32.mxu0 %v497
  %779 = vmatmul.mubr.f32.gmra.mrb[0].mxu0 %v496
  %v780 = vpop.f32.mrb[0].mxu0
  %v781 = vadd.f32 %v686, %v780
  %v782 = vpop.f32.mrb[0].mxu0
  %783 = vmatprep.mubr.f32.mxu0 %v502
  %784 = vmatmul.mubr.f32.gmra.mrb[0].mxu0 %v501
  %v785 = vpop.f32.mrb[0].mxu0
  %v786 = vadd.f32 %v691, %v785
  %v787 = vpop.f32.mrb[0].mxu0
  %788 = vmatprep.mubr.f32.mxu0 %v507
  %789 = vmatmul.mubr.f32.gmra.mrb[0].mxu0 %v506
  %v790 = vpop.f32.mrb[0].mxu0
  %v791 = vadd.f32 %v696, %v790
  %v792 = vpop.f32.mrb[0].mxu0
  %793 = vmatprep.mubr.f32.mxu0 %v512
  %794 = vmatmul.mubr.f32.gmra.mrb[0].mxu0 %v511
  %v795 = vpop.f32.mrb[0].mxu0
  %v796 = vadd.f32 %v701, %v795
  %v797 = vpop.f32.mrb[0].mxu0
  %798 = vmatprep.mubr.f32.mxu0 %v517
  %799 = vmatmul.mubr.f32.gmra.mrb[0].mxu0 %v516
  %v800 = vpop.f32.mrb[0].mxu0
  %v801 = vadd.f32 %v706, %v800
  %v802 = vpop.f32.mrb[0].mxu0
  %803 = vdwg.mxu0
  %804 = vmatprep.subr.mxu0 0.0
  %805 = vmatpush1.msra.mxu0 %v583
  %806 = vmatprep.subr.mxu0 0.0
  %807 = vmatpush1.msra.mxu0 %v584
  %808 = vmatprep.subr.mxu0 0.0
  %809 = vmatpush1.msra.mxu0 %v585
  %810 = vmatprep.subr.mxu0 0.0
  %811 = vmatpush1.msra.mxu0 %v586
  %812 = vmatprep.subr.mxu0 0.0
  %813 = vmatpush1.msra.mxu0 %v587
  %814 = vmatprep.subr.mxu0 0.0
  %815 = vmatpush1.msra.mxu0 %v588
  %816 = vmatprep.subr.mxu0 0.0
  %817 = vmatpush1.msra.mxu0 %v589
  %818 = vmatprep.subr.mxu0 0.0
  %819 = vmatpush1.msra.mxu0 %v590
  %820 = vmatprep.subr.mxu0 0.0
  %821 = vmatpush1.msra.mxu0 0.0
  %822 = vmatprep.subr.mxu0 0.0
  %823 = vmatpush1.msra.mxu0 0.0
  %824 = vmatprep.subr.mxu0 0.0
  %825 = vmatpush1.msra.mxu0 0.0
  %826 = vmatprep.subr.mxu0 0.0
  %827 = vmatpush1.msra.mxu0 0.0
  %828 = vmatprep.subr.mxu0 0.0
  %829 = vmatpush1.msra.mxu0 0.0
  %830 = vmatprep.subr.mxu0 0.0
  %831 = vmatpush1.msra.mxu0 0.0
  %832 = vmatprep.subr.mxu0 0.0
  %833 = vmatpush1.msra.mxu0 0.0
  %834 = vmatprep.subr.mxu0 0.0
  %835 = vmatpush1.msra.mxu0 0.0
  %836 = vmatprep.subr.mxu0 0.0
  %837 = vmatpush1.msra.mxu0 0.0
  %838 = vmatprep.subr.mxu0 0.0
  %839 = vmatpush1.msra.mxu0 0.0
  %840 = vmatprep.subr.mxu0 0.0
  %841 = vmatpush1.msra.mxu0 0.0
  %842 = vmatprep.subr.mxu0 0.0
  %843 = vmatpush1.msra.mxu0 0.0
  %844 = vmatprep.subr.mxu0 0.0
  %845 = vmatpush1.msra.mxu0 0.0
  %846 = vmatprep.subr.mxu0 0.0
  %847 = vmatpush1.msra.mxu0 0.0
  %848 = vmatprep.subr.mxu0 0.0
  %849 = vmatpush1.msra.mxu0 0.0
  %850 = vmatprep.subr.mxu0 0.0
  %851 = vmatpush1.msra.mxu0 0.0
  %852 = vmatprep.subr.mxu0 0.0
  %853 = vmatpush1.msra.mxu0 0.0
  %854 = vmatprep.subr.mxu0 0.0
  %855 = vmatpush1.msra.mxu0 0.0
  %856 = vmatprep.subr.mxu0 0.0
  %857 = vmatpush1.msra.mxu0 0.0
  %858 = vmatprep.subr.mxu0 0.0
  %859 = vmatpush1.msra.mxu0 0.0
  %860 = vmatprep.subr.mxu0 0.0
  %861 = vmatpush1.msra.mxu0 0.0
  %862 = vmatprep.subr.mxu0 0.0
  %863 = vmatpush1.msra.mxu0 0.0
  %864 = vmatprep.subr.mxu0 0.0
  %865 = vmatpush1.msra.mxu0 0.0
  %866 = vmatprep.subr.mxu0 0.0
  %867 = vmatpush1.msra.mxu0 0.0
  %868 = vmatprep.mubr.f32.mxu0 0.0
  %869 = vmatmul.mubr.f32.gmra.mrb[0].mxu0 %v597
  %v870 = vpop.f32.mrb[0].mxu0
  %v871 = vadd.f32 %v776, %v870
  %v872 = vpop.f32.mrb[0].mxu0
  %873 = vmatprep.mubr.f32.mxu0 0.0
  %874 = vmatmul.mubr.f32.gmra.mrb[0].mxu0 %v600
  %v875 = vpop.f32.mrb[0].mxu0
  %v876 = vadd.f32 %v781, %v875
  %v877 = vpop.f32.mrb[0].mxu0
  %878 = vmatprep.mubr.f32.mxu0 0.0
  %879 = vmatmul.mubr.f32.gmra.mrb[0].mxu0 %v603
  %v880 = vpop.f32.mrb[0].mxu0
  %v881 = vadd.f32 %v786, %v880
  %v882 = vpop.f32.mrb[0].mxu0
  %883 = vmatprep.mubr.f32.mxu0 0.0
  %884 = vmatmul.mubr.f32.gmra.mrb[0].mxu0 %v606
  %v885 = vpop.f32.mrb[0].mxu0
  %v886 = vadd.f32 %v791, %v885
  %v887 = vpop.f32.mrb[0].mxu0
  %888 = vmatprep.mubr.f32.mxu0 0.0
  %889 = vmatmul.mubr.f32.gmra.mrb[0].mxu0 %v609
  %v890 = vpop.f32.mrb[0].mxu0
  %v891 = vadd.f32 %v796, %v890
  %v892 = vpop.f32.mrb[0].mxu0
  %893 = vmatprep.mubr.f32.mxu0 0.0
  %894 = vmatmul.mubr.f32.gmra.mrb[0].mxu0 %v612
  %v895 = vpop.f32.mrb[0].mxu0
  %v896 = vadd.f32 %v801, %v895
  %v897 = vpop.f32.mrb[0].mxu0
  %898 = vdwg.mxu0
  %v899 = vmax.f32 %v871, 0.0
  %v900 = vmax.f32 %v876, 0.0
  %v901 = vmax.f32 %v881, 0.0
  %v902 = vmax.f32 %v886, 0.0
  %v903 = vmax.f32 %v891, 0.0
  %v904 = vmax.f32 %v896, 0.0
  %vm908 = vcmask 1045504
  %v909 = vrot.slane %v899, 2
  %v910 = vrot.slane %v900, 2
  %v911 = vsel %vm908, %v909, %v910
  %v912 = vrot.slane %v902, 2
  %v915 = vmax.f32 %v899, %v911
  %v916 = vmax.f32 %v902, %v912
  %v920 = vrot.slane %v901, 2
  %v921 = vsel %vm908, %v910, %v920
  %v922 = vsel %vm908, %v920, %v912
  %v923 = vrot.slane %v903, 2
  %v924 = vrot.slane %v904, 2
  %v925 = vsel %vm908, %v923, %v924
  %v930 = vmax.f32 %v900, %v921
  %v931 = vmax.f32 %v901, %v922
  %v932 = vmax.f32 %v903, %v925
  %v933 = vmax.f32 %v904, %v924
  %vm938 = vcmask 1043456
  %v939 = vrot.slane %v930, 4
  %v940 = vrot.slane %v931, 4
  %v941 = vsel %vm938, %v939, %v940
  %v942 = vrot.slane %v932, 4
  %v943 = vrot.slane %v933, 4
  %v944 = vsel %vm938, %v942, %v943
  %v947 = vmax.f32 %v915, %v941
  %v948 = vmax.f32 %v916, %v944
  %v950 = vrot.slane %v947, 4
  %v953 = vrot.slane %v948, 4
  %v955 = vld [vmem:[%s1 + $0x2a0] sm:$0xff]
  %v956 = vld [vmem:[%s1 + $0x2a8] sm:$0xff]
  %v957 = vld [vmem:[%s1 + $0x2b0] sm:$0xff]
  %v958 = vld [vmem:[%s1 + $0x2b8] sm:$0xff]
  %v959 = vld [vmem:[%s1 + $0x2c0] sm:$0xff]
  %v960 = vld [vmem:[%s1 + $0x2c8] sm:$0xff]
  %v961 = vld [vmem:[%s1 + $0x2d0] sm:$0xff]
  %v962 = vld [vmem:[%s1 + $0x2d8] sm:$0xff]
  %v963 = vld [vmem:[%s1 + $0x2e0] sm:$0xff]
  %v964 = vld [vmem:[%s1 + $0x2e8] sm:$0xff]
  %v965 = vld [vmem:[%s1 + $0x2f0] sm:$0xff]
  %v966 = vld [vmem:[%s1 + $0x2f8] sm:$0xff]
  %v967 = vld [vmem:[%s1 + $0x300] sm:$0xff]
  %v968 = vld [vmem:[%s1 + $0x308] sm:$0xff]
  %v969 = vld [vmem:[%s1 + $0x310] sm:$0xff]
  %v970 = vld [vmem:[%s1 + $0x318] sm:$0xff]
  %v971 = vld [vmem:[%s1 + $0x320] sm:$0xff]
  %v972 = vld [vmem:[%s1 + $0x328] sm:$0xff]
  %v973 = vld [vmem:[%s1 + $0x330] sm:$0xff]
  %v974 = vld [vmem:[%s1 + $0x338] sm:$0xff]
  %v975 = vld [vmem:[%s1 + $0x340] sm:$0xff]
  %v976 = vld [vmem:[%s1 + $0x348] sm:$0xff]
  %v977 = vld [vmem:[%s1 + $0x350] sm:$0xff]
  %v978 = vld [vmem:[%s1 + $0x358] sm:$0xff]
  %v979 = vld [vmem:[%s1 + $0x360] sm:$0xff]
  %v980 = vld [vmem:[%s1 + $0x368] sm:$0xff]
  %v981 = vld [vmem:[%s1 + $0x370] sm:$0xff]
  %v982 = vld [vmem:[%s1 + $0x378] sm:$0xff]
  %v983 = vld [vmem:[%s1 + $0x380] sm:$0xff]
  %v984 = vld [vmem:[%s1 + $0x388] sm:$0xff]
  %v985 = vld [vmem:[%s1 + $0x390] sm:$0xff]
  %v986 = vld [vmem:[%s1 + $0x398] sm:$0xff]
  %v987 = vld [vmem:[%s1 + $0x3a0] sm:$0xff]
  %v988 = vld [vmem:[%s1 + $0x3a8] sm:$0xff]
  %v989 = vld [vmem:[%s1 + $0x3b0] sm:$0xff]
  %v990 = vld [vmem:[%s1 + $0x3b8] sm:$0xff]
  %v991 = vld [vmem:[%s1 + $0x3c0] sm:$0xff]
  %v992 = vld [vmem:[%s1 + $0x3c8] sm:$0xff]
  %v993 = vld [vmem:[%s1 + $0x3d0] sm:$0xff]
  %v994 = vld [vmem:[%s1 + $0x3d8] sm:$0xff]
  %v995 = vld [vmem:[%s1 + $0x3e0] sm:$0xff]
  %v996 = vld [vmem:[%s1 + $0x3e8] sm:$0xff]
  %v997 = vld [vmem:[%s1 + $0x3f0] sm:$0xff]
  %v998 = vld [vmem:[%s1 + $0x3f8] sm:$0xff]
  %v999 = vld [vmem:[%s1 + $0x400] sm:$0xff]
  %v1000 = vld [vmem:[%s1 + $0x408] sm:$0xff]
  %v1001 = vld [vmem:[%s1 + $0x410] sm:$0xff]
  %v1002 = vld [vmem:[%s1 + $0x418] sm:$0xff]
  %v1003 = vld [vmem:[%s1 + $0x420] sm:$0xff]
  %v1004 = vld [vmem:[%s1 + $0x428] sm:$0xff]
  %v1005 = vld [vmem:[%s1 + $0x430] sm:$0xff]
  %v1006 = vld [vmem:[%s1 + $0x438] sm:$0xff]
  %v1007 = vld [vmem:[%s1 + $0x440] sm:$0xff]
  %v1008 = vld [vmem:[%s1 + $0x448] sm:$0xff]
  %v1009 = vld [vmem:[%s1 + $0x450] sm:$0xff]
  %v1010 = vld [vmem:[%s1 + $0x458] sm:$0xff]
  %v1011 = vld [vmem:[%s1 + $0x460] sm:$0xff]
  %v1012 = vld [vmem:[%s1 + $0x468] sm:$0xff]
  %v1013 = vld [vmem:[%s1 + $0x470] sm:$0xff]
  %v1014 = vld [vmem:[%s1 + $0x478] sm:$0xff]
  %v1015 = vld [vmem:[%s1 + $0x480] sm:$0xff]
  %v1016 = vld [vmem:[%s1 + $0x488] sm:$0xff]
  %v1017 = vld [vmem:[%s1 + $0x490] sm:$0xff]
  %v1018 = vld [vmem:[%s1 + $0x498] sm:$0xff]
  %v1019 = vld [vmem:[%s1 + $0x4a0] sm:$0x1]
  %v1020 = vlaneseq
  %v1021 = vshrl.u32 %v1020, 7
  %v1022 = vsub.s32 0, %v1021
  %v1023 = vrot.slane %v1019, %v1022
  %1024 = vmatprep.subr.mxu0 0.0
  %1025 = vmatpush1.msra.mxu0 %v955
  %1026 = vmatprep.subr.mxu0 0.0
  %1027 = vmatpush1.msra.mxu0 %v956
  %1028 = vmatprep.subr.mxu0 0.0
  %1029 = vmatpush1.msra.mxu0 %v957
  %1030 = vmatprep.subr.mxu0 0.0
  %1031 = vmatpush1.msra.mxu0 %v958
  %1032 = vmatprep.subr.mxu0 0.0
  %1033 = vmatpush1.msra.mxu0 %v959
  %1034 = vmatprep.subr.mxu0 0.0
  %1035 = vmatpush1.msra.mxu0 %v960
  %1036 = vmatprep.subr.mxu0 0.0
  %1037 = vmatpush1.msra.mxu0 %v961
  %1038 = vmatprep.subr.mxu0 0.0
  %1039 = vmatpush1.msra.mxu0 %v962
  %1040 = vmatprep.subr.mxu0 0.0
  %1041 = vmatpush1.msra.mxu0 %v963
  %1042 = vmatprep.subr.mxu0 0.0
  %1043 = vmatpush1.msra.mxu0 %v964
  %1044 = vmatprep.subr.mxu0 0.0
  %1045 = vmatpush1.msra.mxu0 %v965
  %1046 = vmatprep.subr.mxu0 0.0
  %1047 = vmatpush1.msra.mxu0 %v966
  %1048 = vmatprep.subr.mxu0 0.0
  %1049 = vmatpush1.msra.mxu0 %v967
  %1050 = vmatprep.subr.mxu0 0.0
  %1051 = vmatpush1.msra.mxu0 %v968
  %1052 = vmatprep.subr.mxu0 0.0
  %1053 = vmatpush1.msra.mxu0 %v969
  %1054 = vmatprep.subr.mxu0 0.0
  %1055 = vmatpush1.msra.mxu0 %v970
  %1056 = vmatprep.subr.mxu0 0.0
  %1057 = vmatpush1.msra.mxu0 %v971
  %1058 = vmatprep.subr.mxu0 0.0
  %1059 = vmatpush1.msra.mxu0 %v972
  %1060 = vmatprep.subr.mxu0 0.0
  %1061 = vmatpush1.msra.mxu0 %v973
  %1062 = vmatprep.subr.mxu0 0.0
  %1063 = vmatpush1.msra.mxu0 %v974
  %1064 = vmatprep.subr.mxu0 0.0
  %1065 = vmatpush1.msra.mxu0 %v975
  %1066 = vmatprep.subr.mxu0 0.0
  %1067 = vmatpush1.msra.mxu0 %v976
  %1068 = vmatprep.subr.mxu0 0.0
  %1069 = vmatpush1.msra.mxu0 %v977
  %1070 = vmatprep.subr.mxu0 0.0
  %1071 = vmatpush1.msra.mxu0 %v978
  %1072 = vmatprep.subr.mxu0 0.0
  %1073 = vmatpush1.msra.mxu0 %v979
  %1074 = vmatprep.subr.mxu0 0.0
  %1075 = vmatpush1.msra.mxu0 %v980
  %1076 = vmatprep.subr.mxu0 0.0
  %1077 = vmatpush1.msra.mxu0 %v981
  %1078 = vmatprep.subr.mxu0 0.0
  %1079 = vmatpush1.msra.mxu0 %v982
  %1080 = vmatprep.subr.mxu0 0.0
  %1081 = vmatpush1.msra.mxu0 %v983
  %1082 = vmatprep.subr.mxu0 0.0
  %1083 = vmatpush1.msra.mxu0 %v984
  %1084 = vmatprep.subr.mxu0 0.0
  %1085 = vmatpush1.msra.mxu0 %v985
  %1086 = vmatprep.subr.mxu0 0.0
  %1087 = vmatpush1.msra.mxu0 %v986
  %1088 = vmatprep.mubr.f32.mxu0 %v950
  %1089 = vmatmul.mubr.f32.gmra.mrb[0].mxu0 %v947
  %v1090 = vpop.f32.mrb[0].mxu0
  %v1091 = vadd.f32 %v1023, %v1090
  %v1092 = vpop.f32.mrb[0].mxu0
  %1093 = vdwg.mxu0
  %1094 = vmatprep.subr.mxu0 0.0
  %1095 = vmatpush1.msra.mxu0 %v987
  %1096 = vmatprep.subr.mxu0 0.0
  %1097 = vmatpush1.msra.mxu0 %v988
  %1098 = vmatprep.subr.mxu0 0.0
  %1099 = vmatpush1.msra.mxu0 %v989
  %1100 = vmatprep.subr.mxu0 0.0
  %1101 = vmatpush1.msra.mxu0 %v990
  %1102 = vmatprep.subr.mxu0 0.0
  %1103 = vmatpush1.msra.mxu0 %v991
  %1104 = vmatprep.subr.mxu0 0.0
  %1105 = vmatpush1.msra.mxu0 %v992
  %1106 = vmatprep.subr.mxu0 0.0
  %1107 = vmatpush1.msra.mxu0 %v993
  %1108 = vmatprep.subr.mxu0 0.0
  %1109 = vmatpush1.msra.mxu0 %v994
  %1110 = vmatprep.subr.mxu0 0.0
  %1111 = vmatpush1.msra.mxu0 %v995
  %1112 = vmatprep.subr.mxu0 0.0
  %1113 = vmatpush1.msra.mxu0 %v996
  %1114 = vmatprep.subr.mxu0 0.0
  %1115 = vmatpush1.msra.mxu0 %v997
  %1116 = vmatprep.subr.mxu0 0.0
  %1117 = vmatpush1.msra.mxu0 %v998
  %1118 = vmatprep.subr.mxu0 0.0
  %1119 = vmatpush1.msra.mxu0 %v999
  %1120 = vmatprep.subr.mxu0 0.0
  %1121 = vmatpush1.msra.mxu0 %v1000
  %1122 = vmatprep.subr.mxu0 0.0
  %1123 = vmatpush1.msra.mxu0 %v1001
  %1124 = vmatprep.subr.mxu0 0.0
  %1125 = vmatpush1.msra.mxu0 %v1002
  %1126 = vmatprep.subr.mxu0 0.0
  %1127 = vmatpush1.msra.mxu0 %v1003
  %1128 = vmatprep.subr.mxu0 0.0
  %1129 = vmatpush1.msra.mxu0 %v1004
  %1130 = vmatprep.subr.mxu0 0.0
  %1131 = vmatpush1.msra.mxu0 %v1005
  %1132 = vmatprep.subr.mxu0 0.0
  %1133 = vmatpush1.msra.mxu0 %v1006
  %1134 = vmatprep.subr.mxu0 0.0
  %1135 = vmatpush1.msra.mxu0 %v1007
  %1136 = vmatprep.subr.mxu0 0.0
  %1137 = vmatpush1.msra.mxu0 %v1008
  %1138 = vmatprep.subr.mxu0 0.0
  %1139 = vmatpush1.msra.mxu0 %v1009
  %1140 = vmatprep.subr.mxu0 0.0
  %1141 = vmatpush1.msra.mxu0 %v1010
  %1142 = vmatprep.subr.mxu0 0.0
  %1143 = vmatpush1.msra.mxu0 %v1011
  %1144 = vmatprep.subr.mxu0 0.0
  %1145 = vmatpush1.msra.mxu0 %v1012
  %1146 = vmatprep.subr.mxu0 0.0
  %1147 = vmatpush1.msra.mxu0 %v1013
  %1148 = vmatprep.subr.mxu0 0.0
  %1149 = vmatpush1.msra.mxu0 %v1014
  %1150 = vmatprep.subr.mxu0 0.0
  %1151 = vmatpush1.msra.mxu0 %v1015
  %1152 = vmatprep.subr.mxu0 0.0
  %1153 = vmatpush1.msra.mxu0 %v1016
  %1154 = vmatprep.subr.mxu0 0.0
  %1155 = vmatpush1.msra.mxu0 %v1017
  %1156 = vmatprep.subr.mxu0 0.0
  %1157 = vmatpush1.msra.mxu0 %v1018
  %1158 = vmatprep.mubr.f32.mxu0 %v953
  %1159 = vmatmul.mubr.f32.gmra.mrb[0].mxu0 %v948
  %v1160 = vpop.f32.mrb[0].mxu0
  %v1161 = vadd.f32 %v1091, %v1160
  %v1162 = vpop.f32.mrb[0].mxu0
  %1163 = vdwg.mxu0
  %v1164 = vmax.f32 %v1161, 0.0
  %v1165 = vld [vmem:[%s1 + $0x4a8] sm:$0xff]
  %v1166 = vld [vmem:[%s1 + $0x4b0] sm:$0xff]
  %v1167 = vld [vmem:[%s1 + $0x4b8] sm:$0xff]
  %v1168 = vld [vmem:[%s1 + $0x4c0] sm:$0xff]
  %v1169 = vld [vmem:[%s1 + $0x4c8] sm:$0xff]
  %v1170 = vld [vmem:[%s1 + $0x4d0] sm:$0xff]
  %v1171 = vld [vmem:[%s1 + $0x4d8] sm:$0xff]
  %v1172 = vld [vmem:[%s1 + $0x4e0] sm:$0xff]
  %v1173 = vld [vmem:[%s1 + $0x4e8] sm:$0xff]
  %v1174 = vld [vmem:[%s1 + $0x4f0] sm:$0xff]
  %v1175 = vld [vmem:[%s1 + $0x4f8] sm:$0xff]
  %v1176 = vld [vmem:[%s1 + $0x500] sm:$0xff]
  %v1177 = vld [vmem:[%s1 + $0x508] sm:$0xff]
  %v1178 = vld [vmem:[%s1 + $0x510] sm:$0xff]
  %v1179 = vld [vmem:[%s1 + $0x518] sm:$0xff]
  %v1180 = vld [vmem:[%s1 + $0x520] sm:$0xff]
  %v1181 = vld [vmem:[%s1 + $0x528] sm:$0x1]
  %v1182 = vlaneseq
  %v1183 = vshrl.u32 %v1182, 7
  %v1184 = vsub.s32 0, %v1183
  %v1185 = vrot.slane %v1181, %v1184
  %1186 = vmatprep.subr.mxu0 0.0
  %1187 = vmatpush1.msra.mxu0 %v1165
  %1188 = vmatprep.subr.mxu0 0.0
  %1189 = vmatpush1.msra.mxu0 %v1166
  %1190 = vmatprep.subr.mxu0 0.0
  %1191 = vmatpush1.msra.mxu0 %v1167
  %1192 = vmatprep.subr.mxu0 0.0
  %1193 = vmatpush1.msra.mxu0 %v1168
  %1194 = vmatprep.subr.mxu0 0.0
  %1195 = vmatpush1.msra.mxu0 %v1169
  %1196 = vmatprep.subr.mxu0 0.0
  %1197 = vmatpush1.msra.mxu0 %v1170
  %1198 = vmatprep.subr.mxu0 0.0
  %1199 = vmatpush1.msra.mxu0 %v1171
  %1200 = vmatprep.subr.mxu0 0.0
  %1201 = vmatpush1.msra.mxu0 %v1172
  %1202 = vmatprep.subr.mxu0 0.0
  %1203 = vmatpush1.msra.mxu0 %v1173
  %1204 = vmatprep.subr.mxu0 0.0
  %1205 = vmatpush1.msra.mxu0 %v1174
  %1206 = vmatprep.subr.mxu0 0.0
  %1207 = vmatpush1.msra.mxu0 %v1175
  %1208 = vmatprep.subr.mxu0 0.0
  %1209 = vmatpush1.msra.mxu0 %v1176
  %1210 = vmatprep.subr.mxu0 0.0
  %1211 = vmatpush1.msra.mxu0 %v1177
  %1212 = vmatprep.subr.mxu0 0.0
  %1213 = vmatpush1.msra.mxu0 %v1178
  %1214 = vmatprep.subr.mxu0 0.0
  %1215 = vmatpush1.msra.mxu0 %v1179
  %1216 = vmatprep.subr.mxu0 0.0
  %1217 = vmatpush1.msra.mxu0 %v1180
  %1218 = vmatprep.subr.mxu0 0.0
  %1219 = vmatpush1.msra.mxu0 0.0
  %1220 = vmatprep.subr.mxu0 0.0
  %1221 = vmatpush1.msra.mxu0 0.0
  %1222 = vmatprep.subr.mxu0 0.0
  %1223 = vmatpush1.msra.mxu0 0.0
  %1224 = vmatprep.subr.mxu0 0.0
  %1225 = vmatpush1.msra.mxu0 0.0
  %1226 = vmatprep.subr.mxu0 0.0
  %1227 = vmatpush1.msra.mxu0 0.0
  %1228 = vmatprep.subr.mxu0 0.0
  %1229 = vmatpush1.msra.mxu0 0.0
  %1230 = vmatprep.subr.mxu0 0.0
  %1231 = vmatpush1.msra.mxu0 0.0
  %1232 = vmatprep.subr.mxu0 0.0
  %1233 = vmatpush1.msra.mxu0 0.0
  %1234 = vmatprep.subr.mxu0 0.0
  %1235 = vmatpush1.msra.mxu0 0.0
  %1236 = vmatprep.subr.mxu0 0.0
  %1237 = vmatpush1.msra.mxu0 0.0
  %1238 = vmatprep.subr.mxu0 0.0
  %1239 = vmatpush1.msra.mxu0 0.0
  %1240 = vmatprep.subr.mxu0 0.0
  %1241 = vmatpush1.msra.mxu0 0.0
  %1242 = vmatprep.subr.mxu0 0.0
  %1243 = vmatpush1.msra.mxu0 0.0
  %1244 = vmatprep.subr.mxu0 0.0
  %1245 = vmatpush1.msra.mxu0 0.0
  %1246 = vmatprep.subr.mxu0 0.0
  %1247 = vmatpush1.msra.mxu0 0.0
  %1248 = vmatprep.subr.mxu0 0.0
  %1249 = vmatpush1.msra.mxu0 0.0
  %1250 = vmatprep.mubr.f32.mxu0 0.0
  %1251 = vmatmul.mubr.f32.gmra.mrb[0].mxu0 %v1164
  %v1252 = vpop.f32.mrb[0].mxu0
  %v1253 = vadd.f32 %v1185, %v1252
  %v1254 = vpop.f32.mrb[0].mxu0
  %1255 = vdwg.mxu0
  %v1256 = vmax.f32 %v1253, 0.0
  %v1257 = vlaneseq
  %v1258 = vand.u32 %v1257, 127
  %vm1259 = vcmp.lt.s32.totalorder %v1258, 3
  %v1260 = vsel %vm1259, %v1256, -1e+30
  %vm1261 = vcmask 1041408
  %v1262 = vsel %vm1261, %v1260, -inf
  %1263 = vmax.xlane.f32.xlu0 %v1262
  %v1264 = vpop.xlane.xlu0 %1263
  %v1265 = vsub.f32 %v1256, %v1264
  %v1266 = vmul.f32 %v1265, 1.442695
  %v1267 = vpow.pop %v1266
  %v1268 = vsel %vm1259, %v1267, 0.0
  %v1269 = vsel %vm1261, %v1268, 0.0
  %1270 = vadd.xlane.f32.xlu0 %v1269
  %v1271 = vpop.xlane.xlu0 %1270
  %v1272 = vrcp.pop %v1271
  %v1273 = vmul.f32 %v1268, %v1272
  %v1274 = vld [vmem:[%s1 + $0x530] sm:$0x1]
  %v1275 = vlaneseq
  %v1276 = vshrl.u32 %v1275, 7
  %v1277 = vsub.s32 0, %v1276
  %v1278 = vrot.slane %v1274, %v1277
  %v1279 = vmul.f32 %v1256, %v1278
  %v1280 = vsel %vm1261, %v1279, 0.0
  %1281 = vadd.xlane.f32.xlu0 %v1280
  %v1282 = vpop.xlane.xlu0 %1281
  %v1283 = vld [vmem:[%s1 + $0x538] sm:$0x1]
  %v1284 = vlaneseq
  %v1285 = vshrl.u32 %v1284, 7
  %v1286 = vsub.s32 0, %v1285
  %v1287 = vrot.slane %v1283, %v1286
  %v1288 = vadd.f32 %v1282, %v1287
  %v1289 = vmax.f32 %v1288, 0.0
  %vm1290 = vcmp.eq.s32.totalorder %v1258, 3
  %1292 = vset.pattern.permute.xlu0 0
  %1293 = vperm.xlu0 %1292, %v1289
  %v1294 = vpop.permute.xlu0 %1293
  %v1296 = vsel %vm1290, %v1294, 0.0
  %v1297 = vadd.f32 %v1273, %v1296
  %1298 = vst [vmem:[%s2] sm:$0x3] %v1297
  // Predicated region
  $region10: #{actor_critic_forward.1} parent=0 // pred_check
    _
  $region11: #{actor_critic_forward.1} parent=0 // pred_check_branch
    %1300 = sbr.rel (0) target = $region13
  $region12: #{actor_critic_forward.1} parent=0 // pred_region
    _
  $region13: #{actor_critic_forward.1} parent=0 // pred_fallthru
    _
  // Predicated region
  $region14: #{actor_critic_forward.1} parent=0 // pred_check
    _
  $region15: #{actor_critic_forward.1} parent=0 // pred_check_branch
    %1302 = sbr.rel (0) target = $region17
  $region16: #{actor_critic_forward.1} parent=0 // pred_region
    _
  $region17: #{actor_critic_forward.1} parent=0 // pred_fallthru
    _

</llo_original>
